<compile_context>
chip_gen: v5e
topology: v5e:2x2
jax: 0.10.0
libtpu: 0.0.40
codegen_flags: <defaults>
</compile_context>

<pallas_src>
import functools

import jax
import jax.numpy as jnp
from jax import lax
from jax.experimental import pallas as pl
from jax.experimental.pallas import tpu as pltpu


# --------------------------------------------------------------------------
# Fused kernel: both GRU directions, grid = (ndir, time blocks).
# --------------------------------------------------------------------------
def gru_fused_kernel(maxlen_ref, len_ref, x_ref, h0_ref, wih_ref, bih_ref,
                     whh_ref, bhh_ref, out_ref, hf_ref, gx_scr, h_scr,
                     *, T_blk, H, n_tblocks, unroll):
    # maxlen_ref: (1,)  int32  SMEM (scalar prefetch) -- max valid length
    # len_ref:   (B_pad, 1) int32   per-row valid lengths
    # x_ref:     (T_blk, B_pad, D)  bf16 time-major input block
    # h0_ref:    (B_pad, H) f32     initial hidden state (this direction)
    # wih_ref:   (D, 3H)  bf16      input weights^T, gate order [r, z, n]
    # bih_ref:   (1, 3H)  f32       input bias
    # whh_ref:   (H, 3H)  bf16      hidden weights^T
    # bhh_ref:   (1, 3H)  f32       hidden bias
    # out_ref:   (T_blk, B_pad, H) f32  per-step outputs (zeros for t >= length)
    # hf_ref:    (B_pad, H) f32     final hidden state (this direction)
    # gx_scr:    (T_blk, B_pad, 3H) f32 hoisted input projection
    # h_scr:     (B_pad, H) f32     hidden-state carry across time blocks
    d = pl.program_id(0)            # direction: 0 = forward, 1 = backward
    tb = pl.program_id(1)           # time-block index in processing order

    # Physical time-block index (backward direction walks blocks from the end).
    pb = jnp.where(d == 0, tb, n_tblocks - 1 - tb)
    t0 = pb * T_blk

    @pl.when(tb == 0)
    def _():
        h_scr[...] = h0_ref[...]

    # Skip blocks that are entirely past every sequence length.
    block_active = t0 < maxlen_ref[0]

    @pl.when(block_active)
    def _():
        # ---- hoisted input projection: one matmul, M = T_blk * B_pad -------
        Tb, Bp, Din = x_ref.shape
        x2 = x_ref[...].reshape(Tb * Bp, Din)                    # layout no-op
        gx = jnp.dot(x2, wih_ref[...], preferred_element_type=jnp.float32)
        gx_scr[...] = gx.reshape(Tb, Bp, 3 * H) + bih_ref[...]

        # ---- recurrence: only (B,H)@(H,3H) + gate math per step ------------
        lens = len_ref[...]                                      # (B_pad, 1)
        whh = whh_ref[...]                                       # (H, 3H) bf16
        bhh = bhh_ref[...]                                       # (1, 3H) f32

        def step(s, h):
            # Position inside the block: forward order for d=0, reversed for d=1.
            p = jnp.where(d == 0, s, T_blk - 1 - s)
            gx_p = gx_scr[p]                                     # (B_pad, 3H)
            gh = jnp.dot(h.astype(jnp.bfloat16), whh,
                         preferred_element_type=jnp.float32) + bhh
            r = jax.nn.sigmoid(gx_p[:, 0:H] + gh[:, 0:H])
            z = jax.nn.sigmoid(gx_p[:, H:2 * H] + gh[:, H:2 * H])
            n = jnp.tanh(gx_p[:, 2 * H:3 * H] + r * gh[:, 2 * H:3 * H])
            h_new = n + z * (h - n)
            valid = (t0 + p) < lens                              # (B_pad, 1)
            out_ref[p] = jnp.where(valid, h_new, 0.0)            # zero past length
            return jnp.where(valid, h_new, h)                    # freeze past length

        h_scr[...] = lax.fori_loop(0, T_blk, step, h_scr[...], unroll=unroll)

    @pl.when(jnp.logical_not(block_active))
    def _():
        out_ref[...] = jnp.zeros_like(out_ref)

    # Final state: write once, on the last processed time block.
    @pl.when(tb == n_tblocks - 1)
    def _():
        hf_ref[...] = h_scr[...]


# --------------------------------------------------------------------------
# Wrapper.
# --------------------------------------------------------------------------
def _round_up(n, m):
    return ((n + m - 1) // m) * m


def _vmem_capacity_bytes():
    try:
        info = pltpu.get_tpu_info()
        return int(getattr(info, "vmem_capacity_bytes", 64 * 1024 * 1024))
    except Exception:
        return 64 * 1024 * 1024          # conservative fallback (v7x-sized)


def _vmem_model(B_pad, D, H):
    """Approx. per-time-step and fixed VMEM bytes for one grid step."""
    threeH = 3 * H
    per_t = B_pad * (2 * D * 2          # x block, bf16, double-buffered
                     + 2 * H * 4        # out block, f32, double-buffered
                     + threeH * 4)      # gx scratch, f32
    fixed = (2 * (D * threeH * 2        # W_ih^T bf16 (double-buffered)
                  + H * threeH * 2      # W_hh^T bf16
                  + 2 * threeH * 4      # biases f32
                  + 2 * B_pad * H * 4   # h0 in + hf out
                  + B_pad * 4)          # lengths
             + B_pad * H * 4)           # h carry scratch
    return per_t, fixed


def _pick_time_block(T, B_pad, D, H, requested, vmem_cap):
    per_t, fixed = _vmem_model(B_pad, D, H)
    budget = int(vmem_cap * 0.55)       # leave headroom for Mosaic internals
    t_fit = (budget - fixed) // max(per_t, 1)
    t_blk = min(int(requested), _round_up(T, 8), max(int(t_fit), 8))
    return max(8, (t_blk // 8) * 8)


@functools.partial(jax.jit, static_argnames=("t_blk",))
def gru_encoder_pallas(x, lengths, h0, w_ih, w_hh, b_ih, b_hh, *, t_blk=256):
    """1-layer (bi)directional GRU with length masking.

    x: (B, T, D); lengths: (B,) int; h0: (ndir, B, H)
    w_ih: (ndir, 3H, D); w_hh: (ndir, 3H, H); b_ih / b_hh: (ndir, 3H)
    Returns: output (B, T, ndir*H) f32 and final state (ndir, B, H) f32.
    """
    ndir, threeH, D = w_ih.shape
    H = threeH // 3
    B, T, _ = x.shape

    # Pad batch to a bf16 sublane-pack multiple (16) so the in-kernel reshape
    # (T_blk, B_pad, D) -> (T_blk*B_pad, D) is tile-aligned; padded rows have
    # length 0 and are fully masked.
    B_pad = _round_up(B, 16)
    vmem_cap = _vmem_capacity_bytes()
    T_blk = _pick_time_block(T, B_pad, D, H, t_blk, vmem_cap)
    T_pad = _round_up(T, T_blk)
    n_tb = T_pad // T_blk

    # Time-major bf16 input (one XLA transpose), padded time steps are masked.
    x_tm = jnp.swapaxes(x, 0, 1).astype(jnp.bfloat16)            # (T, B, D)
    x_p = jnp.zeros((T_pad, B_pad, D), jnp.bfloat16).at[:T, :B].set(x_tm)

    lengths = lengths.astype(jnp.int32)
    len_col = jnp.zeros((B_pad, 1), jnp.int32).at[:B, 0].set(lengths)
    max_len = jnp.max(lengths).reshape(1)                        # scalar prefetch
    h0_p = jnp.zeros((ndir, B_pad, H), jnp.float32).at[:, :B].set(
        h0.astype(jnp.float32))

    wih_t = jnp.transpose(w_ih, (0, 2, 1)).astype(jnp.bfloat16)  # (ndir, D, 3H)
    whh_t = jnp.transpose(w_hh, (0, 2, 1)).astype(jnp.bfloat16)  # (ndir, H, 3H)
    bih_r = b_ih.reshape(ndir, 1, threeH).astype(jnp.float32)
    bhh_r = b_hh.reshape(ndir, 1, threeH).astype(jnp.float32)

    per_t, fixed = _vmem_model(B_pad, D, H)
    vmem_limit = int(min(vmem_cap * 0.9,
                         max(fixed + per_t * T_blk + (8 << 20), 32 << 20)))

    unroll = min(T_blk, 8 if H <= 256 else 4)
    kernel = functools.partial(gru_fused_kernel, T_blk=T_blk, H=H,
                               n_tblocks=n_tb, unroll=unroll)

    def xt_block(d, t, ml):      # physical time block (reversed for backward dir)
        return (jnp.where(d == 0, t, n_tb - 1 - t), 0, 0)

    def out_block(d, t, ml):
        return (d, jnp.where(d == 0, t, n_tb - 1 - t), 0, 0)

    out, hf = pl.pallas_call(
        kernel,
        out_shape=(jax.ShapeDtypeStruct((ndir, T_pad, B_pad, H), jnp.float32),
                   jax.ShapeDtypeStruct((ndir, B_pad, H), jnp.float32)),
        grid_spec=pltpu.PrefetchScalarGridSpec(
            num_scalar_prefetch=1,
            grid=(ndir, n_tb),
            in_specs=[
                pl.BlockSpec((B_pad, 1), lambda d, t, ml: (0, 0)),          # lengths
                pl.BlockSpec((T_blk, B_pad, D), xt_block),                  # x (time-major)
                pl.BlockSpec((None, B_pad, H), lambda d, t, ml: (d, 0, 0)),   # h0
                pl.BlockSpec((None, D, threeH), lambda d, t, ml: (d, 0, 0)),  # W_ih^T
                pl.BlockSpec((None, 1, threeH), lambda d, t, ml: (d, 0, 0)),  # b_ih
                pl.BlockSpec((None, H, threeH), lambda d, t, ml: (d, 0, 0)),  # W_hh^T
                pl.BlockSpec((None, 1, threeH), lambda d, t, ml: (d, 0, 0)),  # b_hh
            ],
            out_specs=(
                pl.BlockSpec((None, T_blk, B_pad, H), out_block),             # outputs
                pl.BlockSpec((None, B_pad, H), lambda d, t, ml: (d, 0, 0)),   # final state
            ),
            scratch_shapes=[
                pltpu.VMEM((T_blk, B_pad, threeH), jnp.float32),   # gx (input projection)
                pltpu.VMEM((B_pad, H), jnp.float32),               # hidden-state carry
            ],
        ),
        compiler_params=pltpu.CompilerParams(
            # TODO(synk): on v7x use CORE_PARALLEL on the direction axis to run
            # the two directions on the two TensorCores.
            dimension_semantics=("parallel", "arbitrary"),
            vmem_limit_bytes=vmem_limit,
        ),
    )(max_len, len_col, x_p, h0_p, wih_t, bih_r, whh_t, bhh_r)

    # (ndir, T, B, H) -> (B, T, ndir, H) -> (B, T, ndir*H): the transpose also
    # realizes the direction concat (the trailing reshape is free).
    out_bt = jnp.transpose(out[:, :T, :B, :], (2, 1, 0, 3))
    output = out_bt.reshape(B, T, ndir * H)
    return output, hf[:, :B, :]


# --------------------------------------------------------------------------
# Module wrapper.
# --------------------------------------------------------------------------
class DynamicEncoderPallas:
    """JAX/Pallas equivalent of DynamicEncoder (1-layer GRU, batch_first)."""

    def __init__(self, params, key):
        self.H = params['hidden_dim']
        self.D = params['input_dim']
        self.bidir = params['is_bidirectional']
        self.batch_size = params['batch_size']
        self.ndir = 2 if self.bidir else 1
        k = 1.0 / (self.H ** 0.5)
        keys = jax.random.split(key, 4 * self.ndir)
        w_ih, w_hh, b_ih, b_hh = [], [], [], []
        for d in range(self.ndir):
            w_ih.append(jax.random.uniform(keys[4 * d + 0], (3 * self.H, self.D),
                                           jnp.float32, -k, k))
            w_hh.append(jax.random.uniform(keys[4 * d + 1], (3 * self.H, self.H),
                                           jnp.float32, -k, k))
            b_ih.append(jax.random.uniform(keys[4 * d + 2], (3 * self.H,),
                                           jnp.float32, -k, k))
            b_hh.append(jax.random.uniform(keys[4 * d + 3], (3 * self.H,),
                                           jnp.float32, -k, k))
        self.w_ih = jnp.stack(w_ih)     # (ndir, 3H, D)
        self.w_hh = jnp.stack(w_hh)     # (ndir, 3H, H)
        self.b_ih = jnp.stack(b_ih)     # (ndir, 3H)
        self.b_hh = jnp.stack(b_hh)     # (ndir, 3H)

    def init_state(self, in_batch=True):
        b = self.batch_size if in_batch else 1
        return jnp.zeros((self.ndir, b, self.H), jnp.float32)

    def __call__(self, input_sequence, input_lengths, state):
        # input_sequence: (B, T, D); input_lengths: (B,); state: (ndir, B, H)
        return gru_encoder_pallas(input_sequence, input_lengths, state,
                                  self.w_ih, self.w_hh, self.b_ih, self.b_hh)


# --------------------------------------------------------------------------
# Pure-JAX reference (lax.scan GRU, reverse-within-length for the backward
# direction).  Mirrors the kernel's dtype policy: x / W_ih / W_hh / h operand
# rounded to bf16 for the matmuls, everything else f32.
# --------------------------------------------------------------------------
def reverse_by_length(x, lengths):
    """x: (B, T, F). Reverses each sequence within its valid length."""
    T = x.shape[1]
    t = jnp.arange(T)
    idx = jnp.clip(lengths[:, None] - 1 - t[None, :], 0, T - 1)
    return jnp.take_along_axis(x, idx[:, :, None], axis=1)


def gru_direction_ref(x, lengths, h0, w_ih, w_hh, b_ih, b_hh):
    T = x.shape[1]
    H = h0.shape[-1]
    xq = x.astype(jnp.bfloat16).astype(jnp.float32)
    wih_q = w_ih.astype(jnp.bfloat16).astype(jnp.float32)
    whh_q = w_hh.astype(jnp.bfloat16).astype(jnp.float32)
    hp = lax.Precision.HIGHEST

    def step(h, inp):
        xt, t = inp
        gx = jnp.dot(xt, wih_q.T, precision=hp) + b_ih
        hq = h.astype(jnp.bfloat16).astype(jnp.float32)
        gh = jnp.dot(hq, whh_q.T, precision=hp) + b_hh
        r = jax.nn.sigmoid(gx[:, :H] + gh[:, :H])
        z = jax.nn.sigmoid(gx[:, H:2 * H] + gh[:, H:2 * H])
        n = jnp.tanh(gx[:, 2 * H:] + r * gh[:, 2 * H:])
        h_new = (1.0 - z) * n + z * h
        mask = (t < lengths)[:, None]
        return jnp.where(mask, h_new, h), jnp.where(mask, h_new, 0.0)

    hT, ys = lax.scan(step, h0, (jnp.swapaxes(xq, 0, 1), jnp.arange(T)))
    return jnp.swapaxes(ys, 0, 1), hT


def encoder_ref(enc, x, lengths, state):
    T = x.shape[1]
    lengths = lengths.astype(jnp.int32)
    out_f, hf_f = gru_direction_ref(x, lengths, state[0], enc.w_ih[0],
                                    enc.w_hh[0], enc.b_ih[0], enc.b_hh[0])
    if enc.ndir == 1:
        return out_f, hf_f[None]
    x_rev = reverse_by_length(x, lengths)
    out_r, hf_b = gru_direction_ref(x_rev, lengths, state[1], enc.w_ih[1],
                                    enc.w_hh[1], enc.b_ih[1], enc.b_hh[1])
    out_b = reverse_by_length(out_r, lengths)
    valid = jnp.arange(T)[None, :, None] < lengths[:, None, None]
    out_b = jnp.where(valid, out_b, 0.0)
    return (jnp.concatenate([out_f, out_b], axis=-1),
            jnp.stack([hf_f, hf_b], axis=0))


if __name__ == "__main__":
    B, T, D, H = 4, 8, 8, 32
    params = {'hidden_dim': H, 'input_dim': D, 'batch_size': B,
              'is_bidirectional': True}

    key = jax.random.PRNGKey(0)
    k_w, k_x = jax.random.split(key)

    enc = DynamicEncoderPallas(params, k_w)

    x = jax.random.normal(k_x, (B, T, D), jnp.float32)
    lengths = jnp.array([8, 5, 3, 1], jnp.int32)
    state0 = enc.init_state()

    output, state = enc(x, lengths, state0)
    output = jax.block_until_ready(output)
    state = jax.block_until_ready(state)

    assert output.shape == (B, T, 2 * H)
    assert state.shape == (2, B, H)

    out_ref, state_ref = encoder_ref(enc, x, lengths, state0)
    err_o = float(jnp.max(jnp.abs(output - out_ref)))
    err_s = float(jnp.max(jnp.abs(state - state_ref)))
    assert err_o < 2e-3, f"output max abs err {err_o}"
    assert err_s < 2e-3, f"state max abs err {err_s}"

    print("KERNEL_OK")
</pallas_src>

<mosaic_0001>
module attributes {stable_mosaic.version = 11 : i64} {
  func.func @gru_fused_kernel(%arg0: i32, %arg1: i32, %arg2: memref<1xi32, #tpu.memory_space<smem>>, %arg3: memref<16x1xi32, #tpu.memory_space<vmem>>, %arg4: memref<8x16x8xbf16, #tpu.memory_space<vmem>>, %arg5: memref<1x16x32xf32, #tpu.memory_space<vmem>>, %arg6: memref<1x8x96xbf16, #tpu.memory_space<vmem>>, %arg7: memref<1x1x96xf32, #tpu.memory_space<vmem>>, %arg8: memref<1x32x96xbf16, #tpu.memory_space<vmem>>, %arg9: memref<1x1x96xf32, #tpu.memory_space<vmem>>, %arg10: memref<1x8x16x32xf32, #tpu.memory_space<vmem>>, %arg11: memref<1x16x32xf32, #tpu.memory_space<vmem>>, %arg12: memref<8x16x96xf32, #tpu.memory_space<vmem>>, %arg13: memref<16x32xf32, #tpu.memory_space<vmem>>) attributes {dimension_semantics = [#tpu.dimension_semantics<parallel>, #tpu.dimension_semantics<arbitrary>], iteration_bounds = array<i64: 2, 1>, scalar_prefetch = 1 : i64, scratch_operands = 2 : i64, tpu.core_type = #tpu.core_type<tc>, window_params = [{pipeline_mode = #tpu.pipeline_mode<synchronous>, transform_indices = @transform_0, window_bounds = array<i64: 16, 1>}, {transform_indices = @transform_1, window_bounds = array<i64: 8, 16, 8>}, {transform_indices = @transform_2, window_bounds = array<i64: 1, 16, 32>}, {transform_indices = @transform_3, window_bounds = array<i64: 1, 8, 96>}, {transform_indices = @transform_4, window_bounds = array<i64: 1, 1, 96>}, {transform_indices = @transform_5, window_bounds = array<i64: 1, 32, 96>}, {transform_indices = @transform_6, window_bounds = array<i64: 1, 1, 96>}, {transform_indices = @transform_7, window_bounds = array<i64: 1, 8, 16, 32>}, {transform_indices = @transform_8, window_bounds = array<i64: 1, 16, 32>}]} {
    %c0_i32 = arith.constant 0 : i32
    %0 = arith.cmpi eq, %arg0, %c0_i32 : i32
    %c0_i32_0 = arith.constant 0 : i32
    %1 = arith.subi %c0_i32_0, %arg1 : i32
    %2 = arith.select %0, %arg1, %1 : i32
    %c8_i32 = arith.constant 8 : i32
    %3 = arith.muli %2, %c8_i32 : i32
    %c0_i32_1 = arith.constant 0 : i32
    %4 = arith.cmpi eq, %arg1, %c0_i32_1 : i32
    %5 = arith.extui %4 : i1 to i32
    %c0_i32_2 = arith.constant 0 : i32
    %6 = arith.cmpi ne, %5, %c0_i32_2 : i32
    scf.if %6 {
      %c0_7 = arith.constant 0 : index
      %c0_8 = arith.constant 0 : index
      %c0_9 = arith.constant 0 : index
      %17 = vector.load %arg5[%c0_7, %c0_8, %c0_9] : memref<1x16x32xf32, #tpu.memory_space<vmem>>, vector<1x16x32xf32>
      %18 = vector.shape_cast %17 : vector<1x16x32xf32> to vector<16x32xf32>
      %c0_10 = arith.constant 0 : index
      %c0_11 = arith.constant 0 : index
      %19 = vector.load %arg13[%c0_10, %c0_11] : memref<16x32xf32, #tpu.memory_space<vmem>>, vector<16x32xf32>
      tpu.vector_store %arg13[%c0_10, %c0_11], %18 {strides = array<i32>} : memref<16x32xf32, #tpu.memory_space<vmem>>, vector<16x32xf32>,
    } else {
    }
    %c0 = arith.constant 0 : index
    %7 = memref.load %arg2[%c0] : memref<1xi32, #tpu.memory_space<smem>>
    %8 = arith.cmpi slt, %3, %7 : i32
    %9 = arith.extui %8 : i1 to i32
    %c0_i32_3 = arith.constant 0 : i32
    %10 = arith.cmpi ne, %9, %c0_i32_3 : i32
    scf.if %10 {
      %c0_7 = arith.constant 0 : index
      %c0_8 = arith.constant 0 : index
      %c0_9 = arith.constant 0 : index
      %17 = vector.load %arg4[%c0_7, %c0_8, %c0_9] : memref<8x16x8xbf16, #tpu.memory_space<vmem>>, vector<8x16x8xbf16>
      %18 = vector.shape_cast %17 : vector<8x16x8xbf16> to vector<128x8xbf16>
      %c0_10 = arith.constant 0 : index
      %c0_11 = arith.constant 0 : index
      %c0_12 = arith.constant 0 : index
      %19 = vector.load %arg6[%c0_10, %c0_11, %c0_12] : memref<1x8x96xbf16, #tpu.memory_space<vmem>>, vector<1x8x96xbf16>
      %20 = vector.shape_cast %19 : vector<1x8x96xbf16> to vector<8x96xbf16>
      %cst = arith.constant dense<0.000000e+00> : vector<128x96xf32>
      %21 = tpu.matmul %18, %20, %cst {dimension_numbers = #tpu.dot_dimension_numbers<[1], [0], [0], [1], [0, 0, 1, 1], [], []>} : vector<128x8xbf16>, vector<8x96xbf16>, vector<128x96xf32> -> vector<128x96xf32>
      %22 = vector.shape_cast %21 : vector<128x96xf32> to vector<8x16x96xf32>
      %c0_13 = arith.constant 0 : index
      %c0_14 = arith.constant 0 : index
      %c0_15 = arith.constant 0 : index
      %23 = vector.load %arg7[%c0_13, %c0_14, %c0_15] : memref<1x1x96xf32, #tpu.memory_space<vmem>>, vector<1x1x96xf32>
      %24 = vector.shape_cast %23 : vector<1x1x96xf32> to vector<1x96xf32>
      %25 = vector.shape_cast %24 : vector<1x96xf32> to vector<1x1x96xf32>
      %26 = vector.broadcast %25 : vector<1x1x96xf32> to vector<8x16x96xf32>
      %27 = arith.addf %22, %26 : vector<8x16x96xf32>
      %c0_16 = arith.constant 0 : index
      %c0_17 = arith.constant 0 : index
      %c0_18 = arith.constant 0 : index
      %28 = vector.load %arg12[%c0_16, %c0_17, %c0_18] : memref<8x16x96xf32, #tpu.memory_space<vmem>>, vector<8x16x96xf32>
      tpu.vector_store %arg12[%c0_16, %c0_17, %c0_18], %27 {strides = array<i32>} : memref<8x16x96xf32, #tpu.memory_space<vmem>>, vector<8x16x96xf32>,
      %c0_19 = arith.constant 0 : index
      %c0_20 = arith.constant 0 : index
      %29 = vector.load %arg3[%c0_19, %c0_20] : memref<16x1xi32, #tpu.memory_space<vmem>>, vector<16x1xi32>
      %c0_21 = arith.constant 0 : index
      %c0_22 = arith.constant 0 : index
      %c0_23 = arith.constant 0 : index
      %30 = vector.load %arg8[%c0_21, %c0_22, %c0_23] : memref<1x32x96xbf16, #tpu.memory_space<vmem>>, vector<1x32x96xbf16>
      %31 = vector.shape_cast %30 : vector<1x32x96xbf16> to vector<32x96xbf16>
      %c0_24 = arith.constant 0 : index
      %c0_25 = arith.constant 0 : index
      %c0_26 = arith.constant 0 : index
      %32 = vector.load %arg9[%c0_24, %c0_25, %c0_26] : memref<1x1x96xf32, #tpu.memory_space<vmem>>, vector<1x1x96xf32>
      %33 = vector.shape_cast %32 : vector<1x1x96xf32> to vector<1x96xf32>
      %c0_27 = arith.constant 0 : index
      %c0_28 = arith.constant 0 : index
      %34 = vector.load %arg13[%c0_27, %c0_28] : memref<16x32xf32, #tpu.memory_space<vmem>>, vector<16x32xf32>
      %c0_i32_29 = arith.constant 0 : i32
      %c0_i32_30 = arith.constant 0 : i32
      %35 = arith.cmpi eq, %arg0, %c0_i32_30 : i32
      %c7_i32 = arith.constant 7 : i32
      %36 = arith.subi %c7_i32, %c0_i32_29 : i32
      %37 = arith.select %35, %c0_i32_29, %36 : i32
      %38 = arith.index_cast %37 : i32 to index
      %c0_31 = arith.constant 0 : index
      %c0_32 = arith.constant 0 : index
      %39 = vector.load %arg12[%38, %c0_31, %c0_32] : memref<8x16x96xf32, #tpu.memory_space<vmem>>, vector<1x16x96xf32>
      %40 = vector.shape_cast %39 : vector<1x16x96xf32> to vector<16x96xf32>
      %41 = arith.truncf %34 : vector<16x32xf32> to vector<16x32xbf16>
      %cst_33 = arith.constant dense<0.000000e+00> : vector<16x96xf32>
      %42 = tpu.matmul %41, %31, %cst_33 {dimension_numbers = #tpu.dot_dimension_numbers<[1], [0], [0], [1], [0, 0, 1, 1], [], []>} : vector<16x32xbf16>, vector<32x96xbf16>, vector<16x96xf32> -> vector<16x96xf32>
      %43 = vector.broadcast %33 : vector<1x96xf32> to vector<16x96xf32>
      %44 = arith.addf %42, %43 : vector<16x96xf32>
      %45 = vector.extract_strided_slice %40 {offsets = [0, 0], sizes = [16, 32], strides = [1, 1]} : vector<16x96xf32> to vector<16x32xf32>
      %46 = vector.extract_strided_slice %44 {offsets = [0, 0], sizes = [16, 32], strides = [1, 1]} : vector<16x96xf32> to vector<16x32xf32>
      %47 = arith.addf %45, %46 : vector<16x32xf32>
      %48 = arith.negf %47 : vector<16x32xf32>
      %49 = math.exp %48 : vector<16x32xf32>
      %cst_34 = arith.constant 1.000000e+00 : f32
      %50 = vector.broadcast %cst_34 : f32 to vector<16x32xf32>
      %51 = arith.addf %50, %49 : vector<16x32xf32>
      %52 = arith.divf %50, %51 : vector<16x32xf32>
      %53 = vector.extract_strided_slice %40 {offsets = [0, 32], sizes = [16, 32], strides = [1, 1]} : vector<16x96xf32> to vector<16x32xf32>
      %54 = vector.extract_strided_slice %44 {offsets = [0, 32], sizes = [16, 32], strides = [1, 1]} : vector<16x96xf32> to vector<16x32xf32>
      %55 = arith.addf %53, %54 : vector<16x32xf32>
      %56 = arith.negf %55 : vector<16x32xf32>
      %57 = math.exp %56 : vector<16x32xf32>
      %cst_35 = arith.constant 1.000000e+00 : f32
      %58 = vector.broadcast %cst_35 : f32 to vector<16x32xf32>
      %59 = arith.addf %58, %57 : vector<16x32xf32>
      %60 = arith.divf %58, %59 : vector<16x32xf32>
      %61 = vector.extract_strided_slice %40 {offsets = [0, 64], sizes = [16, 32], strides = [1, 1]} : vector<16x96xf32> to vector<16x32xf32>
      %62 = vector.extract_strided_slice %44 {offsets = [0, 64], sizes = [16, 32], strides = [1, 1]} : vector<16x96xf32> to vector<16x32xf32>
      %63 = arith.mulf %52, %62 : vector<16x32xf32>
      %64 = arith.addf %61, %63 : vector<16x32xf32>
      %65 = math.tanh %64 : vector<16x32xf32>
      %66 = arith.subf %34, %65 : vector<16x32xf32>
      %67 = arith.mulf %60, %66 : vector<16x32xf32>
      %68 = arith.addf %65, %67 : vector<16x32xf32>
      %69 = arith.addi %3, %37 : i32
      %70 = vector.broadcast %69 : i32 to vector<16x1xi32>
      %71 = arith.cmpi slt, %70, %29 : vector<16x1xi32>
      %cst_36 = arith.constant 0.000000e+00 : f32
      %72 = vector.shape_cast %71 : vector<16x1xi1> to vector<16x1xi1>
      %73 = vector.broadcast %72 : vector<16x1xi1> to vector<16x32xi1>
      %74 = vector.broadcast %cst_36 : f32 to vector<16x32xf32>
      %75 = arith.select %73, %68, %74 : vector<16x32xi1>, vector<16x32xf32>
      %c0_37 = arith.constant 0 : index
      %76 = arith.index_cast %37 : i32 to index
      %c0_38 = arith.constant 0 : index
      %c0_39 = arith.constant 0 : index
      %77 = vector.load %arg10[%c0_37, %76, %c0_38, %c0_39] : memref<1x8x16x32xf32, #tpu.memory_space<vmem>>, vector<1x1x16x32xf32>
      %78 = vector.shape_cast %77 : vector<1x1x16x32xf32> to vector<16x32xf32>
      %79 = vector.shape_cast %75 : vector<16x32xf32> to vector<1x1x16x32xf32>
      tpu.vector_store %arg10[%c0_37, %76, %c0_38, %c0_39], %79 {strides = array<i32>} : memref<1x8x16x32xf32, #tpu.memory_space<vmem>>, vector<1x1x16x32xf32>,
      %80 = vector.shape_cast %71 : vector<16x1xi1> to vector<16x1xi1>
      %81 = vector.broadcast %80 : vector<16x1xi1> to vector<16x32xi1>
      %82 = arith.select %81, %68, %34 : vector<16x32xi1>, vector<16x32xf32>
      %c1_i32 = arith.constant 1 : i32
      %c0_i32_40 = arith.constant 0 : i32
      %83 = arith.cmpi eq, %arg0, %c0_i32_40 : i32
      %c7_i32_41 = arith.constant 7 : i32
      %84 = arith.subi %c7_i32_41, %c1_i32 : i32
      %85 = arith.select %83, %c1_i32, %84 : i32
      %86 = arith.index_cast %85 : i32 to index
      %c0_42 = arith.constant 0 : index
      %c0_43 = arith.constant 0 : index
      %87 = vector.load %arg12[%86, %c0_42, %c0_43] : memref<8x16x96xf32, #tpu.memory_space<vmem>>, vector<1x16x96xf32>
      %88 = vector.shape_cast %87 : vector<1x16x96xf32> to vector<16x96xf32>
      %89 = arith.truncf %82 : vector<16x32xf32> to vector<16x32xbf16>
      %cst_44 = arith.constant dense<0.000000e+00> : vector<16x96xf32>
      %90 = tpu.matmul %89, %31, %cst_44 {dimension_numbers = #tpu.dot_dimension_numbers<[1], [0], [0], [1], [0, 0, 1, 1], [], []>} : vector<16x32xbf16>, vector<32x96xbf16>, vector<16x96xf32> -> vector<16x96xf32>
      %91 = vector.broadcast %33 : vector<1x96xf32> to vector<16x96xf32>
      %92 = arith.addf %90, %91 : vector<16x96xf32>
      %93 = vector.extract_strided_slice %88 {offsets = [0, 0], sizes = [16, 32], strides = [1, 1]} : vector<16x96xf32> to vector<16x32xf32>
      %94 = vector.extract_strided_slice %92 {offsets = [0, 0], sizes = [16, 32], strides = [1, 1]} : vector<16x96xf32> to vector<16x32xf32>
      %95 = arith.addf %93, %94 : vector<16x32xf32>
      %96 = arith.negf %95 : vector<16x32xf32>
      %97 = math.exp %96 : vector<16x32xf32>
      %cst_45 = arith.constant 1.000000e+00 : f32
      %98 = vector.broadcast %cst_45 : f32 to vector<16x32xf32>
      %99 = arith.addf %98, %97 : vector<16x32xf32>
      %100 = arith.divf %98, %99 : vector<16x32xf32>
      %101 = vector.extract_strided_slice %88 {offsets = [0, 32], sizes = [16, 32], strides = [1, 1]} : vector<16x96xf32> to vector<16x32xf32>
      %102 = vector.extract_strided_slice %92 {offsets = [0, 32], sizes = [16, 32], strides = [1, 1]} : vector<16x96xf32> to vector<16x32xf32>
      %103 = arith.addf %101, %102 : vector<16x32xf32>
      %104 = arith.negf %103 : vector<16x32xf32>
      %105 = math.exp %104 : vector<16x32xf32>
      %cst_46 = arith.constant 1.000000e+00 : f32
      %106 = vector.broadcast %cst_46 : f32 to vector<16x32xf32>
      %107 = arith.addf %106, %105 : vector<16x32xf32>
      %108 = arith.divf %106, %107 : vector<16x32xf32>
      %109 = vector.extract_strided_slice %88 {offsets = [0, 64], sizes = [16, 32], strides = [1, 1]} : vector<16x96xf32> to vector<16x32xf32>
      %110 = vector.extract_strided_slice %92 {offsets = [0, 64], sizes = [16, 32], strides = [1, 1]} : vector<16x96xf32> to vector<16x32xf32>
      %111 = arith.mulf %100, %110 : vector<16x32xf32>
      %112 = arith.addf %109, %111 : vector<16x32xf32>
      %113 = math.tanh %112 : vector<16x32xf32>
      %114 = arith.subf %82, %113 : vector<16x32xf32>
      %115 = arith.mulf %108, %114 : vector<16x32xf32>
      %116 = arith.addf %113, %115 : vector<16x32xf32>
      %117 = arith.addi %3, %85 : i32
      %118 = vector.broadcast %117 : i32 to vector<16x1xi32>
      %119 = arith.cmpi slt, %118, %29 : vector<16x1xi32>
      %cst_47 = arith.constant 0.000000e+00 : f32
      %120 = vector.shape_cast %119 : vector<16x1xi1> to vector<16x1xi1>
      %121 = vector.broadcast %120 : vector<16x1xi1> to vector<16x32xi1>
      %122 = vector.broadcast %cst_47 : f32 to vector<16x32xf32>
      %123 = arith.select %121, %116, %122 : vector<16x32xi1>, vector<16x32xf32>
      %c0_48 = arith.constant 0 : index
      %124 = arith.index_cast %85 : i32 to index
      %c0_49 = arith.constant 0 : index
      %c0_50 = arith.constant 0 : index
      %125 = vector.load %arg10[%c0_48, %124, %c0_49, %c0_50] : memref<1x8x16x32xf32, #tpu.memory_space<vmem>>, vector<1x1x16x32xf32>
      %126 = vector.shape_cast %125 : vector<1x1x16x32xf32> to vector<16x32xf32>
      %127 = vector.shape_cast %123 : vector<16x32xf32> to vector<1x1x16x32xf32>
      tpu.vector_store %arg10[%c0_48, %124, %c0_49, %c0_50], %127 {strides = array<i32>} : memref<1x8x16x32xf32, #tpu.memory_space<vmem>>, vector<1x1x16x32xf32>,
      %128 = vector.shape_cast %119 : vector<16x1xi1> to vector<16x1xi1>
      %129 = vector.broadcast %128 : vector<16x1xi1> to vector<16x32xi1>
      %130 = arith.select %129, %116, %82 : vector<16x32xi1>, vector<16x32xf32>
      %c2_i32 = arith.constant 2 : i32
      %c0_i32_51 = arith.constant 0 : i32
      %131 = arith.cmpi eq, %arg0, %c0_i32_51 : i32
      %c7_i32_52 = arith.constant 7 : i32
      %132 = arith.subi %c7_i32_52, %c2_i32 : i32
      %133 = arith.select %131, %c2_i32, %132 : i32
      %134 = arith.index_cast %133 : i32 to index
      %c0_53 = arith.constant 0 : index
      %c0_54 = arith.constant 0 : index
      %135 = vector.load %arg12[%134, %c0_53, %c0_54] : memref<8x16x96xf32, #tpu.memory_space<vmem>>, vector<1x16x96xf32>
      %136 = vector.shape_cast %135 : vector<1x16x96xf32> to vector<16x96xf32>
      %137 = arith.truncf %130 : vector<16x32xf32> to vector<16x32xbf16>
      %cst_55 = arith.constant dense<0.000000e+00> : vector<16x96xf32>
      %138 = tpu.matmul %137, %31, %cst_55 {dimension_numbers = #tpu.dot_dimension_numbers<[1], [0], [0], [1], [0, 0, 1, 1], [], []>} : vector<16x32xbf16>, vector<32x96xbf16>, vector<16x96xf32> -> vector<16x96xf32>
      %139 = vector.broadcast %33 : vector<1x96xf32> to vector<16x96xf32>
      %140 = arith.addf %138, %139 : vector<16x96xf32>
      %141 = vector.extract_strided_slice %136 {offsets = [0, 0], sizes = [16, 32], strides = [1, 1]} : vector<16x96xf32> to vector<16x32xf32>
      %142 = vector.extract_strided_slice %140 {offsets = [0, 0], sizes = [16, 32], strides = [1, 1]} : vector<16x96xf32> to vector<16x32xf32>
      %143 = arith.addf %141, %142 : vector<16x32xf32>
      %144 = arith.negf %143 : vector<16x32xf32>
      %145 = math.exp %144 : vector<16x32xf32>
      %cst_56 = arith.constant 1.000000e+00 : f32
      %146 = vector.broadcast %cst_56 : f32 to vector<16x32xf32>
      %147 = arith.addf %146, %145 : vector<16x32xf32>
      %148 = arith.divf %146, %147 : vector<16x32xf32>
      %149 = vector.extract_strided_slice %136 {offsets = [0, 32], sizes = [16, 32], strides = [1, 1]} : vector<16x96xf32> to vector<16x32xf32>
      %150 = vector.extract_strided_slice %140 {offsets = [0, 32], sizes = [16, 32], strides = [1, 1]} : vector<16x96xf32> to vector<16x32xf32>
      %151 = arith.addf %149, %150 : vector<16x32xf32>
      %152 = arith.negf %151 : vector<16x32xf32>
      %153 = math.exp %152 : vector<16x32xf32>
      %cst_57 = arith.constant 1.000000e+00 : f32
      %154 = vector.broadcast %cst_57 : f32 to vector<16x32xf32>
      %155 = arith.addf %154, %153 : vector<16x32xf32>
      %156 = arith.divf %154, %155 : vector<16x32xf32>
      %157 = vector.extract_strided_slice %136 {offsets = [0, 64], sizes = [16, 32], strides = [1, 1]} : vector<16x96xf32> to vector<16x32xf32>
      %158 = vector.extract_strided_slice %140 {offsets = [0, 64], sizes = [16, 32], strides = [1, 1]} : vector<16x96xf32> to vector<16x32xf32>
      %159 = arith.mulf %148, %158 : vector<16x32xf32>
      %160 = arith.addf %157, %159 : vector<16x32xf32>
      %161 = math.tanh %160 : vector<16x32xf32>
      %162 = arith.subf %130, %161 : vector<16x32xf32>
      %163 = arith.mulf %156, %162 : vector<16x32xf32>
      %164 = arith.addf %161, %163 : vector<16x32xf32>
      %165 = arith.addi %3, %133 : i32
      %166 = vector.broadcast %165 : i32 to vector<16x1xi32>
      %167 = arith.cmpi slt, %166, %29 : vector<16x1xi32>
      %cst_58 = arith.constant 0.000000e+00 : f32
      %168 = vector.shape_cast %167 : vector<16x1xi1> to vector<16x1xi1>
      %169 = vector.broadcast %168 : vector<16x1xi1> to vector<16x32xi1>
      %170 = vector.broadcast %cst_58 : f32 to vector<16x32xf32>
      %171 = arith.select %169, %164, %170 : vector<16x32xi1>, vector<16x32xf32>
      %c0_59 = arith.constant 0 : index
      %172 = arith.index_cast %133 : i32 to index
      %c0_60 = arith.constant 0 : index
      %c0_61 = arith.constant 0 : index
      %173 = vector.load %arg10[%c0_59, %172, %c0_60, %c0_61] : memref<1x8x16x32xf32, #tpu.memory_space<vmem>>, vector<1x1x16x32xf32>
      %174 = vector.shape_cast %173 : vector<1x1x16x32xf32> to vector<16x32xf32>
      %175 = vector.shape_cast %171 : vector<16x32xf32> to vector<1x1x16x32xf32>
      tpu.vector_store %arg10[%c0_59, %172, %c0_60, %c0_61], %175 {strides = array<i32>} : memref<1x8x16x32xf32, #tpu.memory_space<vmem>>, vector<1x1x16x32xf32>,
      %176 = vector.shape_cast %167 : vector<16x1xi1> to vector<16x1xi1>
      %177 = vector.broadcast %176 : vector<16x1xi1> to vector<16x32xi1>
      %178 = arith.select %177, %164, %130 : vector<16x32xi1>, vector<16x32xf32>
      %c3_i32 = arith.constant 3 : i32
      %c0_i32_62 = arith.constant 0 : i32
      %179 = arith.cmpi eq, %arg0, %c0_i32_62 : i32
      %c7_i32_63 = arith.constant 7 : i32
      %180 = arith.subi %c7_i32_63, %c3_i32 : i32
      %181 = arith.select %179, %c3_i32, %180 : i32
      %182 = arith.index_cast %181 : i32 to index
      %c0_64 = arith.constant 0 : index
      %c0_65 = arith.constant 0 : index
      %183 = vector.load %arg12[%182, %c0_64, %c0_65] : memref<8x16x96xf32, #tpu.memory_space<vmem>>, vector<1x16x96xf32>
      %184 = vector.shape_cast %183 : vector<1x16x96xf32> to vector<16x96xf32>
      %185 = arith.truncf %178 : vector<16x32xf32> to vector<16x32xbf16>
      %cst_66 = arith.constant dense<0.000000e+00> : vector<16x96xf32>
      %186 = tpu.matmul %185, %31, %cst_66 {dimension_numbers = #tpu.dot_dimension_numbers<[1], [0], [0], [1], [0, 0, 1, 1], [], []>} : vector<16x32xbf16>, vector<32x96xbf16>, vector<16x96xf32> -> vector<16x96xf32>
      %187 = vector.broadcast %33 : vector<1x96xf32> to vector<16x96xf32>
      %188 = arith.addf %186, %187 : vector<16x96xf32>
      %189 = vector.extract_strided_slice %184 {offsets = [0, 0], sizes = [16, 32], strides = [1, 1]} : vector<16x96xf32> to vector<16x32xf32>
      %190 = vector.extract_strided_slice %188 {offsets = [0, 0], sizes = [16, 32], strides = [1, 1]} : vector<16x96xf32> to vector<16x32xf32>
      %191 = arith.addf %189, %190 : vector<16x32xf32>
      %192 = arith.negf %191 : vector<16x32xf32>
      %193 = math.exp %192 : vector<16x32xf32>
      %cst_67 = arith.constant 1.000000e+00 : f32
      %194 = vector.broadcast %cst_67 : f32 to vector<16x32xf32>
      %195 = arith.addf %194, %193 : vector<16x32xf32>
      %196 = arith.divf %194, %195 : vector<16x32xf32>
      %197 = vector.extract_strided_slice %184 {offsets = [0, 32], sizes = [16, 32], strides = [1, 1]} : vector<16x96xf32> to vector<16x32xf32>
      %198 = vector.extract_strided_slice %188 {offsets = [0, 32], sizes = [16, 32], strides = [1, 1]} : vector<16x96xf32> to vector<16x32xf32>
      %199 = arith.addf %197, %198 : vector<16x32xf32>
      %200 = arith.negf %199 : vector<16x32xf32>
      %201 = math.exp %200 : vector<16x32xf32>
      %cst_68 = arith.constant 1.000000e+00 : f32
      %202 = vector.broadcast %cst_68 : f32 to vector<16x32xf32>
      %203 = arith.addf %202, %201 : vector<16x32xf32>
      %204 = arith.divf %202, %203 : vector<16x32xf32>
      %205 = vector.extract_strided_slice %184 {offsets = [0, 64], sizes = [16, 32], strides = [1, 1]} : vector<16x96xf32> to vector<16x32xf32>
      %206 = vector.extract_strided_slice %188 {offsets = [0, 64], sizes = [16, 32], strides = [1, 1]} : vector<16x96xf32> to vector<16x32xf32>
      %207 = arith.mulf %196, %206 : vector<16x32xf32>
      %208 = arith.addf %205, %207 : vector<16x32xf32>
      %209 = math.tanh %208 : vector<16x32xf32>
      %210 = arith.subf %178, %209 : vector<16x32xf32>
      %211 = arith.mulf %204, %210 : vector<16x32xf32>
      %212 = arith.addf %209, %211 : vector<16x32xf32>
      %213 = arith.addi %3, %181 : i32
      %214 = vector.broadcast %213 : i32 to vector<16x1xi32>
      %215 = arith.cmpi slt, %214, %29 : vector<16x1xi32>
      %cst_69 = arith.constant 0.000000e+00 : f32
      %216 = vector.shape_cast %215 : vector<16x1xi1> to vector<16x1xi1>
      %217 = vector.broadcast %216 : vector<16x1xi1> to vector<16x32xi1>
      %218 = vector.broadcast %cst_69 : f32 to vector<16x32xf32>
      %219 = arith.select %217, %212, %218 : vector<16x32xi1>, vector<16x32xf32>
      %c0_70 = arith.constant 0 : index
      %220 = arith.index_cast %181 : i32 to index
      %c0_71 = arith.constant 0 : index
      %c0_72 = arith.constant 0 : index
      %221 = vector.load %arg10[%c0_70, %220, %c0_71, %c0_72] : memref<1x8x16x32xf32, #tpu.memory_space<vmem>>, vector<1x1x16x32xf32>
      %222 = vector.shape_cast %221 : vector<1x1x16x32xf32> to vector<16x32xf32>
      %223 = vector.shape_cast %219 : vector<16x32xf32> to vector<1x1x16x32xf32>
      tpu.vector_store %arg10[%c0_70, %220, %c0_71, %c0_72], %223 {strides = array<i32>} : memref<1x8x16x32xf32, #tpu.memory_space<vmem>>, vector<1x1x16x32xf32>,
      %224 = vector.shape_cast %215 : vector<16x1xi1> to vector<16x1xi1>
      %225 = vector.broadcast %224 : vector<16x1xi1> to vector<16x32xi1>
      %226 = arith.select %225, %212, %178 : vector<16x32xi1>, vector<16x32xf32>
      %c4_i32 = arith.constant 4 : i32
      %c0_i32_73 = arith.constant 0 : i32
      %227 = arith.cmpi eq, %arg0, %c0_i32_73 : i32
      %c7_i32_74 = arith.constant 7 : i32
      %228 = arith.subi %c7_i32_74, %c4_i32 : i32
      %229 = arith.select %227, %c4_i32, %228 : i32
      %230 = arith.index_cast %229 : i32 to index
      %c0_75 = arith.constant 0 : index
      %c0_76 = arith.constant 0 : index
      %231 = vector.load %arg12[%230, %c0_75, %c0_76] : memref<8x16x96xf32, #tpu.memory_space<vmem>>, vector<1x16x96xf32>
      %232 = vector.shape_cast %231 : vector<1x16x96xf32> to vector<16x96xf32>
      %233 = arith.truncf %226 : vector<16x32xf32> to vector<16x32xbf16>
      %cst_77 = arith.constant dense<0.000000e+00> : vector<16x96xf32>
      %234 = tpu.matmul %233, %31, %cst_77 {dimension_numbers = #tpu.dot_dimension_numbers<[1], [0], [0], [1], [0, 0, 1, 1], [], []>} : vector<16x32xbf16>, vector<32x96xbf16>, vector<16x96xf32> -> vector<16x96xf32>
      %235 = vector.broadcast %33 : vector<1x96xf32> to vector<16x96xf32>
      %236 = arith.addf %234, %235 : vector<16x96xf32>
      %237 = vector.extract_strided_slice %232 {offsets = [0, 0], sizes = [16, 32], strides = [1, 1]} : vector<16x96xf32> to vector<16x32xf32>
      %238 = vector.extract_strided_slice %236 {offsets = [0, 0], sizes = [16, 32], strides = [1, 1]} : vector<16x96xf32> to vector<16x32xf32>
      %239 = arith.addf %237, %238 : vector<16x32xf32>
      %240 = arith.negf %239 : vector<16x32xf32>
      %241 = math.exp %240 : vector<16x32xf32>
      %cst_78 = arith.constant 1.000000e+00 : f32
      %242 = vector.broadcast %cst_78 : f32 to vector<16x32xf32>
      %243 = arith.addf %242, %241 : vector<16x32xf32>
      %244 = arith.divf %242, %243 : vector<16x32xf32>
      %245 = vector.extract_strided_slice %232 {offsets = [0, 32], sizes = [16, 32], strides = [1, 1]} : vector<16x96xf32> to vector<16x32xf32>
      %246 = vector.extract_strided_slice %236 {offsets = [0, 32], sizes = [16, 32], strides = [1, 1]} : vector<16x96xf32> to vector<16x32xf32>
      %247 = arith.addf %245, %246 : vector<16x32xf32>
      %248 = arith.negf %247 : vector<16x32xf32>
      %249 = math.exp %248 : vector<16x32xf32>
      %cst_79 = arith.constant 1.000000e+00 : f32
      %250 = vector.broadcast %cst_79 : f32 to vector<16x32xf32>
      %251 = arith.addf %250, %249 : vector<16x32xf32>
      %252 = arith.divf %250, %251 : vector<16x32xf32>
      %253 = vector.extract_strided_slice %232 {offsets = [0, 64], sizes = [16, 32], strides = [1, 1]} : vector<16x96xf32> to vector<16x32xf32>
      %254 = vector.extract_strided_slice %236 {offsets = [0, 64], sizes = [16, 32], strides = [1, 1]} : vector<16x96xf32> to vector<16x32xf32>
      %255 = arith.mulf %244, %254 : vector<16x32xf32>
      %256 = arith.addf %253, %255 : vector<16x32xf32>
      %257 = math.tanh %256 : vector<16x32xf32>
      %258 = arith.subf %226, %257 : vector<16x32xf32>
      %259 = arith.mulf %252, %258 : vector<16x32xf32>
      %260 = arith.addf %257, %259 : vector<16x32xf32>
      %261 = arith.addi %3, %229 : i32
      %262 = vector.broadcast %261 : i32 to vector<16x1xi32>
      %263 = arith.cmpi slt, %262, %29 : vector<16x1xi32>
      %cst_80 = arith.constant 0.000000e+00 : f32
      %264 = vector.shape_cast %263 : vector<16x1xi1> to vector<16x1xi1>
      %265 = vector.broadcast %264 : vector<16x1xi1> to vector<16x32xi1>
      %266 = vector.broadcast %cst_80 : f32 to vector<16x32xf32>
      %267 = arith.select %265, %260, %266 : vector<16x32xi1>, vector<16x32xf32>
      %c0_81 = arith.constant 0 : index
      %268 = arith.index_cast %229 : i32 to index
      %c0_82 = arith.constant 0 : index
      %c0_83 = arith.constant 0 : index
      %269 = vector.load %arg10[%c0_81, %268, %c0_82, %c0_83] : memref<1x8x16x32xf32, #tpu.memory_space<vmem>>, vector<1x1x16x32xf32>
      %270 = vector.shape_cast %269 : vector<1x1x16x32xf32> to vector<16x32xf32>
      %271 = vector.shape_cast %267 : vector<16x32xf32> to vector<1x1x16x32xf32>
      tpu.vector_store %arg10[%c0_81, %268, %c0_82, %c0_83], %271 {strides = array<i32>} : memref<1x8x16x32xf32, #tpu.memory_space<vmem>>, vector<1x1x16x32xf32>,
      %272 = vector.shape_cast %263 : vector<16x1xi1> to vector<16x1xi1>
      %273 = vector.broadcast %272 : vector<16x1xi1> to vector<16x32xi1>
      %274 = arith.select %273, %260, %226 : vector<16x32xi1>, vector<16x32xf32>
      %c5_i32 = arith.constant 5 : i32
      %c0_i32_84 = arith.constant 0 : i32
      %275 = arith.cmpi eq, %arg0, %c0_i32_84 : i32
      %c7_i32_85 = arith.constant 7 : i32
      %276 = arith.subi %c7_i32_85, %c5_i32 : i32
      %277 = arith.select %275, %c5_i32, %276 : i32
      %278 = arith.index_cast %277 : i32 to index
      %c0_86 = arith.constant 0 : index
      %c0_87 = arith.constant 0 : index
      %279 = vector.load %arg12[%278, %c0_86, %c0_87] : memref<8x16x96xf32, #tpu.memory_space<vmem>>, vector<1x16x96xf32>
      %280 = vector.shape_cast %279 : vector<1x16x96xf32> to vector<16x96xf32>
      %281 = arith.truncf %274 : vector<16x32xf32> to vector<16x32xbf16>
      %cst_88 = arith.constant dense<0.000000e+00> : vector<16x96xf32>
      %282 = tpu.matmul %281, %31, %cst_88 {dimension_numbers = #tpu.dot_dimension_numbers<[1], [0], [0], [1], [0, 0, 1, 1], [], []>} : vector<16x32xbf16>, vector<32x96xbf16>, vector<16x96xf32> -> vector<16x96xf32>
      %283 = vector.broadcast %33 : vector<1x96xf32> to vector<16x96xf32>
      %284 = arith.addf %282, %283 : vector<16x96xf32>
      %285 = vector.extract_strided_slice %280 {offsets = [0, 0], sizes = [16, 32], strides = [1, 1]} : vector<16x96xf32> to vector<16x32xf32>
      %286 = vector.extract_strided_slice %284 {offsets = [0, 0], sizes = [16, 32], strides = [1, 1]} : vector<16x96xf32> to vector<16x32xf32>
      %287 = arith.addf %285, %286 : vector<16x32xf32>
      %288 = arith.negf %287 : vector<16x32xf32>
      %289 = math.exp %288 : vector<16x32xf32>
      %cst_89 = arith.constant 1.000000e+00 : f32
      %290 = vector.broadcast %cst_89 : f32 to vector<16x32xf32>
      %291 = arith.addf %290, %289 : vector<16x32xf32>
      %292 = arith.divf %290, %291 : vector<16x32xf32>
      %293 = vector.extract_strided_slice %280 {offsets = [0, 32], sizes = [16, 32], strides = [1, 1]} : vector<16x96xf32> to vector<16x32xf32>
      %294 = vector.extract_strided_slice %284 {offsets = [0, 32], sizes = [16, 32], strides = [1, 1]} : vector<16x96xf32> to vector<16x32xf32>
      %295 = arith.addf %293, %294 : vector<16x32xf32>
      %296 = arith.negf %295 : vector<16x32xf32>
      %297 = math.exp %296 : vector<16x32xf32>
      %cst_90 = arith.constant 1.000000e+00 : f32
      %298 = vector.broadcast %cst_90 : f32 to vector<16x32xf32>
      %299 = arith.addf %298, %297 : vector<16x32xf32>
      %300 = arith.divf %298, %299 : vector<16x32xf32>
      %301 = vector.extract_strided_slice %280 {offsets = [0, 64], sizes = [16, 32], strides = [1, 1]} : vector<16x96xf32> to vector<16x32xf32>
      %302 = vector.extract_strided_slice %284 {offsets = [0, 64], sizes = [16, 32], strides = [1, 1]} : vector<16x96xf32> to vector<16x32xf32>
      %303 = arith.mulf %292, %302 : vector<16x32xf32>
      %304 = arith.addf %301, %303 : vector<16x32xf32>
      %305 = math.tanh %304 : vector<16x32xf32>
      %306 = arith.subf %274, %305 : vector<16x32xf32>
      %307 = arith.mulf %300, %306 : vector<16x32xf32>
      %308 = arith.addf %305, %307 : vector<16x32xf32>
      %309 = arith.addi %3, %277 : i32
      %310 = vector.broadcast %309 : i32 to vector<16x1xi32>
      %311 = arith.cmpi slt, %310, %29 : vector<16x1xi32>
      %cst_91 = arith.constant 0.000000e+00 : f32
      %312 = vector.shape_cast %311 : vector<16x1xi1> to vector<16x1xi1>
      %313 = vector.broadcast %312 : vector<16x1xi1> to vector<16x32xi1>
      %314 = vector.broadcast %cst_91 : f32 to vector<16x32xf32>
      %315 = arith.select %313, %308, %314 : vector<16x32xi1>, vector<16x32xf32>
      %c0_92 = arith.constant 0 : index
      %316 = arith.index_cast %277 : i32 to index
      %c0_93 = arith.constant 0 : index
      %c0_94 = arith.constant 0 : index
      %317 = vector.load %arg10[%c0_92, %316, %c0_93, %c0_94] : memref<1x8x16x32xf32, #tpu.memory_space<vmem>>, vector<1x1x16x32xf32>
      %318 = vector.shape_cast %317 : vector<1x1x16x32xf32> to vector<16x32xf32>
      %319 = vector.shape_cast %315 : vector<16x32xf32> to vector<1x1x16x32xf32>
      tpu.vector_store %arg10[%c0_92, %316, %c0_93, %c0_94], %319 {strides = array<i32>} : memref<1x8x16x32xf32, #tpu.memory_space<vmem>>, vector<1x1x16x32xf32>,
      %320 = vector.shape_cast %311 : vector<16x1xi1> to vector<16x1xi1>
      %321 = vector.broadcast %320 : vector<16x1xi1> to vector<16x32xi1>
      %322 = arith.select %321, %308, %274 : vector<16x32xi1>, vector<16x32xf32>
      %c6_i32 = arith.constant 6 : i32
      %c0_i32_95 = arith.constant 0 : i32
      %323 = arith.cmpi eq, %arg0, %c0_i32_95 : i32
      %c7_i32_96 = arith.constant 7 : i32
      %324 = arith.subi %c7_i32_96, %c6_i32 : i32
      %325 = arith.select %323, %c6_i32, %324 : i32
      %326 = arith.index_cast %325 : i32 to index
      %c0_97 = arith.constant 0 : index
      %c0_98 = arith.constant 0 : index
      %327 = vector.load %arg12[%326, %c0_97, %c0_98] : memref<8x16x96xf32, #tpu.memory_space<vmem>>, vector<1x16x96xf32>
      %328 = vector.shape_cast %327 : vector<1x16x96xf32> to vector<16x96xf32>
      %329 = arith.truncf %322 : vector<16x32xf32> to vector<16x32xbf16>
      %cst_99 = arith.constant dense<0.000000e+00> : vector<16x96xf32>
      %330 = tpu.matmul %329, %31, %cst_99 {dimension_numbers = #tpu.dot_dimension_numbers<[1], [0], [0], [1], [0, 0, 1, 1], [], []>} : vector<16x32xbf16>, vector<32x96xbf16>, vector<16x96xf32> -> vector<16x96xf32>
      %331 = vector.broadcast %33 : vector<1x96xf32> to vector<16x96xf32>
      %332 = arith.addf %330, %331 : vector<16x96xf32>
      %333 = vector.extract_strided_slice %328 {offsets = [0, 0], sizes = [16, 32], strides = [1, 1]} : vector<16x96xf32> to vector<16x32xf32>
      %334 = vector.extract_strided_slice %332 {offsets = [0, 0], sizes = [16, 32], strides = [1, 1]} : vector<16x96xf32> to vector<16x32xf32>
      %335 = arith.addf %333, %334 : vector<16x32xf32>
      %336 = arith.negf %335 : vector<16x32xf32>
      %337 = math.exp %336 : vector<16x32xf32>
      %cst_100 = arith.constant 1.000000e+00 : f32
      %338 = vector.broadcast %cst_100 : f32 to vector<16x32xf32>
      %339 = arith.addf %338, %337 : vector<16x32xf32>
      %340 = arith.divf %338, %339 : vector<16x32xf32>
      %341 = vector.extract_strided_slice %328 {offsets = [0, 32], sizes = [16, 32], strides = [1, 1]} : vector<16x96xf32> to vector<16x32xf32>
      %342 = vector.extract_strided_slice %332 {offsets = [0, 32], sizes = [16, 32], strides = [1, 1]} : vector<16x96xf32> to vector<16x32xf32>
      %343 = arith.addf %341, %342 : vector<16x32xf32>
      %344 = arith.negf %343 : vector<16x32xf32>
      %345 = math.exp %344 : vector<16x32xf32>
      %cst_101 = arith.constant 1.000000e+00 : f32
      %346 = vector.broadcast %cst_101 : f32 to vector<16x32xf32>
      %347 = arith.addf %346, %345 : vector<16x32xf32>
      %348 = arith.divf %346, %347 : vector<16x32xf32>
      %349 = vector.extract_strided_slice %328 {offsets = [0, 64], sizes = [16, 32], strides = [1, 1]} : vector<16x96xf32> to vector<16x32xf32>
      %350 = vector.extract_strided_slice %332 {offsets = [0, 64], sizes = [16, 32], strides = [1, 1]} : vector<16x96xf32> to vector<16x32xf32>
      %351 = arith.mulf %340, %350 : vector<16x32xf32>
      %352 = arith.addf %349, %351 : vector<16x32xf32>
      %353 = math.tanh %352 : vector<16x32xf32>
      %354 = arith.subf %322, %353 : vector<16x32xf32>
      %355 = arith.mulf %348, %354 : vector<16x32xf32>
      %356 = arith.addf %353, %355 : vector<16x32xf32>
      %357 = arith.addi %3, %325 : i32
      %358 = vector.broadcast %357 : i32 to vector<16x1xi32>
      %359 = arith.cmpi slt, %358, %29 : vector<16x1xi32>
      %cst_102 = arith.constant 0.000000e+00 : f32
      %360 = vector.shape_cast %359 : vector<16x1xi1> to vector<16x1xi1>
      %361 = vector.broadcast %360 : vector<16x1xi1> to vector<16x32xi1>
      %362 = vector.broadcast %cst_102 : f32 to vector<16x32xf32>
      %363 = arith.select %361, %356, %362 : vector<16x32xi1>, vector<16x32xf32>
      %c0_103 = arith.constant 0 : index
      %364 = arith.index_cast %325 : i32 to index
      %c0_104 = arith.constant 0 : index
      %c0_105 = arith.constant 0 : index
      %365 = vector.load %arg10[%c0_103, %364, %c0_104, %c0_105] : memref<1x8x16x32xf32, #tpu.memory_space<vmem>>, vector<1x1x16x32xf32>
      %366 = vector.shape_cast %365 : vector<1x1x16x32xf32> to vector<16x32xf32>
      %367 = vector.shape_cast %363 : vector<16x32xf32> to vector<1x1x16x32xf32>
      tpu.vector_store %arg10[%c0_103, %364, %c0_104, %c0_105], %367 {strides = array<i32>} : memref<1x8x16x32xf32, #tpu.memory_space<vmem>>, vector<1x1x16x32xf32>,
      %368 = vector.shape_cast %359 : vector<16x1xi1> to vector<16x1xi1>
      %369 = vector.broadcast %368 : vector<16x1xi1> to vector<16x32xi1>
      %370 = arith.select %369, %356, %322 : vector<16x32xi1>, vector<16x32xf32>
      %c7_i32_106 = arith.constant 7 : i32
      %c0_i32_107 = arith.constant 0 : i32
      %371 = arith.cmpi eq, %arg0, %c0_i32_107 : i32
      %c7_i32_108 = arith.constant 7 : i32
      %372 = arith.subi %c7_i32_108, %c7_i32_106 : i32
      %373 = arith.select %371, %c7_i32_106, %372 : i32
      %374 = arith.index_cast %373 : i32 to index
      %c0_109 = arith.constant 0 : index
      %c0_110 = arith.constant 0 : index
      %375 = vector.load %arg12[%374, %c0_109, %c0_110] : memref<8x16x96xf32, #tpu.memory_space<vmem>>, vector<1x16x96xf32>
      %376 = vector.shape_cast %375 : vector<1x16x96xf32> to vector<16x96xf32>
      %377 = arith.truncf %370 : vector<16x32xf32> to vector<16x32xbf16>
      %cst_111 = arith.constant dense<0.000000e+00> : vector<16x96xf32>
      %378 = tpu.matmul %377, %31, %cst_111 {dimension_numbers = #tpu.dot_dimension_numbers<[1], [0], [0], [1], [0, 0, 1, 1], [], []>} : vector<16x32xbf16>, vector<32x96xbf16>, vector<16x96xf32> -> vector<16x96xf32>
      %379 = vector.broadcast %33 : vector<1x96xf32> to vector<16x96xf32>
      %380 = arith.addf %378, %379 : vector<16x96xf32>
      %381 = vector.extract_strided_slice %376 {offsets = [0, 0], sizes = [16, 32], strides = [1, 1]} : vector<16x96xf32> to vector<16x32xf32>
      %382 = vector.extract_strided_slice %380 {offsets = [0, 0], sizes = [16, 32], strides = [1, 1]} : vector<16x96xf32> to vector<16x32xf32>
      %383 = arith.addf %381, %382 : vector<16x32xf32>
      %384 = arith.negf %383 : vector<16x32xf32>
      %385 = math.exp %384 : vector<16x32xf32>
      %cst_112 = arith.constant 1.000000e+00 : f32
      %386 = vector.broadcast %cst_112 : f32 to vector<16x32xf32>
      %387 = arith.addf %386, %385 : vector<16x32xf32>
      %388 = arith.divf %386, %387 : vector<16x32xf32>
      %389 = vector.extract_strided_slice %376 {offsets = [0, 32], sizes = [16, 32], strides = [1, 1]} : vector<16x96xf32> to vector<16x32xf32>
      %390 = vector.extract_strided_slice %380 {offsets = [0, 32], sizes = [16, 32], strides = [1, 1]} : vector<16x96xf32> to vector<16x32xf32>
      %391 = arith.addf %389, %390 : vector<16x32xf32>
      %392 = arith.negf %391 : vector<16x32xf32>
      %393 = math.exp %392 : vector<16x32xf32>
      %cst_113 = arith.constant 1.000000e+00 : f32
      %394 = vector.broadcast %cst_113 : f32 to vector<16x32xf32>
      %395 = arith.addf %394, %393 : vector<16x32xf32>
      %396 = arith.divf %394, %395 : vector<16x32xf32>
      %397 = vector.extract_strided_slice %376 {offsets = [0, 64], sizes = [16, 32], strides = [1, 1]} : vector<16x96xf32> to vector<16x32xf32>
      %398 = vector.extract_strided_slice %380 {offsets = [0, 64], sizes = [16, 32], strides = [1, 1]} : vector<16x96xf32> to vector<16x32xf32>
      %399 = arith.mulf %388, %398 : vector<16x32xf32>
      %400 = arith.addf %397, %399 : vector<16x32xf32>
      %401 = math.tanh %400 : vector<16x32xf32>
      %402 = arith.subf %370, %401 : vector<16x32xf32>
      %403 = arith.mulf %396, %402 : vector<16x32xf32>
      %404 = arith.addf %401, %403 : vector<16x32xf32>
      %405 = arith.addi %3, %373 : i32
      %406 = vector.broadcast %405 : i32 to vector<16x1xi32>
      %407 = arith.cmpi slt, %406, %29 : vector<16x1xi32>
      %cst_114 = arith.constant 0.000000e+00 : f32
      %408 = vector.shape_cast %407 : vector<16x1xi1> to vector<16x1xi1>
      %409 = vector.broadcast %408 : vector<16x1xi1> to vector<16x32xi1>
      %410 = vector.broadcast %cst_114 : f32 to vector<16x32xf32>
      %411 = arith.select %409, %404, %410 : vector<16x32xi1>, vector<16x32xf32>
      %c0_115 = arith.constant 0 : index
      %412 = arith.index_cast %373 : i32 to index
      %c0_116 = arith.constant 0 : index
      %c0_117 = arith.constant 0 : index
      %413 = vector.load %arg10[%c0_115, %412, %c0_116, %c0_117] : memref<1x8x16x32xf32, #tpu.memory_space<vmem>>, vector<1x1x16x32xf32>
      %414 = vector.shape_cast %413 : vector<1x1x16x32xf32> to vector<16x32xf32>
      %415 = vector.shape_cast %411 : vector<16x32xf32> to vector<1x1x16x32xf32>
      tpu.vector_store %arg10[%c0_115, %412, %c0_116, %c0_117], %415 {strides = array<i32>} : memref<1x8x16x32xf32, #tpu.memory_space<vmem>>, vector<1x1x16x32xf32>,
      %416 = vector.shape_cast %407 : vector<16x1xi1> to vector<16x1xi1>
      %417 = vector.broadcast %416 : vector<16x1xi1> to vector<16x32xi1>
      %418 = arith.select %417, %404, %370 : vector<16x32xi1>, vector<16x32xf32>
      %c8_i32_118 = arith.constant 8 : i32
      %c0_119 = arith.constant 0 : index
      %c0_120 = arith.constant 0 : index
      %419 = vector.load %arg13[%c0_119, %c0_120] : memref<16x32xf32, #tpu.memory_space<vmem>>, vector<16x32xf32>
      tpu.vector_store %arg13[%c0_119, %c0_120], %418 {strides = array<i32>} : memref<16x32xf32, #tpu.memory_space<vmem>>, vector<16x32xf32>,
    } else {
    }
    %true = arith.constant true
    %11 = arith.xori %8, %true : i1
    %12 = arith.extui %11 : i1 to i32
    %c0_i32_4 = arith.constant 0 : i32
    %13 = arith.cmpi ne, %12, %c0_i32_4 : i32
    scf.if %13 {
      %cst = arith.constant 0.000000e+00 : f32
      %17 = vector.broadcast %cst : f32 to vector<8x16x32xf32>
      %c0_7 = arith.constant 0 : index
      %c0_8 = arith.constant 0 : index
      %c0_9 = arith.constant 0 : index
      %c0_10 = arith.constant 0 : index
      %18 = vector.load %arg10[%c0_7, %c0_8, %c0_9, %c0_10] : memref<1x8x16x32xf32, #tpu.memory_space<vmem>>, vector<1x8x16x32xf32>
      %19 = vector.shape_cast %18 : vector<1x8x16x32xf32> to vector<8x16x32xf32>
      %20 = vector.shape_cast %17 : vector<8x16x32xf32> to vector<1x8x16x32xf32>
      tpu.vector_store %arg10[%c0_7, %c0_8, %c0_9, %c0_10], %20 {strides = array<i32>} : memref<1x8x16x32xf32, #tpu.memory_space<vmem>>, vector<1x8x16x32xf32>,
    } else {
    }
    %c0_i32_5 = arith.constant 0 : i32
    %14 = arith.cmpi eq, %arg1, %c0_i32_5 : i32
    %15 = arith.extui %14 : i1 to i32
    %c0_i32_6 = arith.constant 0 : i32
    %16 = arith.cmpi ne, %15, %c0_i32_6 : i32
    scf.if %16 {
      %c0_7 = arith.constant 0 : index
      %c0_8 = arith.constant 0 : index
      %17 = vector.load %arg13[%c0_7, %c0_8] : memref<16x32xf32, #tpu.memory_space<vmem>>, vector<16x32xf32>
      %c0_9 = arith.constant 0 : index
      %c0_10 = arith.constant 0 : index
      %c0_11 = arith.constant 0 : index
      %18 = vector.load %arg11[%c0_9, %c0_10, %c0_11] : memref<1x16x32xf32, #tpu.memory_space<vmem>>, vector<1x16x32xf32>
      %19 = vector.shape_cast %18 : vector<1x16x32xf32> to vector<16x32xf32>
      %20 = vector.shape_cast %17 : vector<16x32xf32> to vector<1x16x32xf32>
      tpu.vector_store %arg11[%c0_9, %c0_10, %c0_11], %20 {strides = array<i32>} : memref<1x16x32xf32, #tpu.memory_space<vmem>>, vector<1x16x32xf32>,
    } else {
    }
    return
  }
  func.func @transform_0(%arg0: i32, %arg1: i32, %arg2: memref<1xi32, #tpu.memory_space<smem>>) -> (i32, i32) {
    %c0_i32 = arith.constant 0 : i32
    %c0_i32_0 = arith.constant 0 : i32
    %c0_i32_1 = arith.constant 0 : i32
    return %c0_i32, %c0_i32_0 : i32, i32
  }
  func.func @transform_1(%arg0: i32, %arg1: i32, %arg2: memref<1xi32, #tpu.memory_space<smem>>) -> (i32, i32, i32) {
    %c0_i32 = arith.constant 0 : i32
    %0 = arith.cmpi eq, %arg0, %c0_i32 : i32
    %c0_i32_0 = arith.constant 0 : i32
    %1 = arith.subi %c0_i32_0, %arg1 : i32
    %2 = arith.select %0, %arg1, %1 : i32
    %c0_i32_1 = arith.constant 0 : i32
    %c0_i32_2 = arith.constant 0 : i32
    %c0_i32_3 = arith.constant 0 : i32
    return %2, %c0_i32_1, %c0_i32_2 : i32, i32, i32
  }
  func.func @transform_2(%arg0: i32, %arg1: i32, %arg2: memref<1xi32, #tpu.memory_space<smem>>) -> (i32, i32, i32) {
    %c0_i32 = arith.constant 0 : i32
    %c0_i32_0 = arith.constant 0 : i32
    %c0_i32_1 = arith.constant 0 : i32
    return %arg0, %c0_i32, %c0_i32_0 : i32, i32, i32
  }
  func.func @transform_3(%arg0: i32, %arg1: i32, %arg2: memref<1xi32, #tpu.memory_space<smem>>) -> (i32, i32, i32) {
    %c0_i32 = arith.constant 0 : i32
    %c0_i32_0 = arith.constant 0 : i32
    %c0_i32_1 = arith.constant 0 : i32
    return %arg0, %c0_i32, %c0_i32_0 : i32, i32, i32
  }
  func.func @transform_4(%arg0: i32, %arg1: i32, %arg2: memref<1xi32, #tpu.memory_space<smem>>) -> (i32, i32, i32) {
    %c0_i32 = arith.constant 0 : i32
    %c0_i32_0 = arith.constant 0 : i32
    %c0_i32_1 = arith.constant 0 : i32
    return %arg0, %c0_i32, %c0_i32_0 : i32, i32, i32
  }
  func.func @transform_5(%arg0: i32, %arg1: i32, %arg2: memref<1xi32, #tpu.memory_space<smem>>) -> (i32, i32, i32) {
    %c0_i32 = arith.constant 0 : i32
    %c0_i32_0 = arith.constant 0 : i32
    %c0_i32_1 = arith.constant 0 : i32
    return %arg0, %c0_i32, %c0_i32_0 : i32, i32, i32
  }
  func.func @transform_6(%arg0: i32, %arg1: i32, %arg2: memref<1xi32, #tpu.memory_space<smem>>) -> (i32, i32, i32) {
    %c0_i32 = arith.constant 0 : i32
    %c0_i32_0 = arith.constant 0 : i32
    %c0_i32_1 = arith.constant 0 : i32
    return %arg0, %c0_i32, %c0_i32_0 : i32, i32, i32
  }
  func.func @transform_7(%arg0: i32, %arg1: i32, %arg2: memref<1xi32, #tpu.memory_space<smem>>) -> (i32, i32, i32, i32) {
    %c0_i32 = arith.constant 0 : i32
    %0 = arith.cmpi eq, %arg0, %c0_i32 : i32
    %c0_i32_0 = arith.constant 0 : i32
    %1 = arith.subi %c0_i32_0, %arg1 : i32
    %2 = arith.select %0, %arg1, %1 : i32
    %c0_i32_1 = arith.constant 0 : i32
    %c0_i32_2 = arith.constant 0 : i32
    %c0_i32_3 = arith.constant 0 : i32
    return %arg0, %2, %c0_i32_1, %c0_i32_2 : i32, i32, i32, i32
  }
  func.func @transform_8(%arg0: i32, %arg1: i32, %arg2: memref<1xi32, #tpu.memory_space<smem>>) -> (i32, i32, i32) {
    %c0_i32 = arith.constant 0 : i32
    %c0_i32_0 = arith.constant 0 : i32
    %c0_i32_1 = arith.constant 0 : i32
    return %arg0, %c0_i32, %c0_i32_0 : i32, i32, i32
  }
}

</mosaic_0001>

<llo_original>
// kernel: gru_encoder_pallas.1
$region0: #{gru_encoder_pallas.1}
  #allocation0 [shape = 'u32[]', space=smem, size = 0x4, offset = 0x4, fixed_abs, tag = 'smem constant byte address 0x4 - core index']
  #allocation1 [shape = 'u32[72,128]{1,0:T(1,128)}', space=vmem, size = 0x9000, scoped, tag = 'internal scratch']
  #allocation2 [shape = 'f32[8,16,96]{2,1,0:T(8,128)}', space=vmem, size = 0x10000, scoped, tag = 'scratch operand']
  #allocation3 [shape = 'f32[16,32]{1,0:T(8,128)}', space=vmem, size = 0x2000, scoped, tag = 'scratch operand']
  #allocation4 [shape = 's32[1]{0}', space=sflag, size = 0x4, scoped, tag = 'scoped memory for gru_encoder_pallas.1']
  #allocation5 [shape = 's32[1]{0:T(128)S(6)}', space=smem, size = 0x200, scoped, tag = 'prefetched SMEM operand 0']
  %s0 = inlined_call_operand.<no memory space> [shape: s32[1], index: 0, kind: input, shape index: {}]
  %s1 = inlined_call_operand.vmem [shape: s32[16,1], index: 1, kind: input, shape index: {}]
  %s2 = inlined_call_operand.vmem [shape: bf16[8,16,8], index: 2, kind: input, shape index: {}]
  %s3 = inlined_call_operand.vmem [shape: f32[2,16,32], index: 3, kind: input, shape index: {}]
  %s4 = inlined_call_operand.vmem [shape: bf16[2,8,96], index: 4, kind: input, shape index: {}]
  %s5 = inlined_call_operand.vmem [shape: f32[2,1,96], index: 5, kind: input, shape index: {}]
  %s6 = inlined_call_operand.vmem [shape: bf16[2,32,96], index: 6, kind: input, shape index: {}]
  %s7 = inlined_call_operand.vmem [shape: f32[2,1,96], index: 7, kind: input, shape index: {}]
  %s8 = inlined_call_operand.vmem [shape: f32[2,8,16,32], index: 8, kind: output, shape index: {0}]
  %s9 = inlined_call_operand.vmem [shape: f32[2,16,32], index: 9, kind: output, shape index: {1}]
  %10 = xla_tuple %s8, %s9
  %s11 = sld [smem:[#allocation0]]
  $region85: #{gru_encoder_pallas.1} parent=0
    _
  %s13 = ssub.s32 1, %s11
  %s14 = scalar_select 0, %s13, %s11
  %15 = sst [smem:[#allocation5]] %s0
  loop: start=0, step=1, limit=4
  $region2: #{gru_encoder_pallas.1} parent=0 // loop_pre_header
    _
  $region3: #{gru_encoder_pallas.1} parent=0 // loop_header
    %s17 = sphi 0, %s21
    %p18 = scmp.ge.s32.totalorder %s17, 4
    %s24 = sphi 0, %s36
    %s25 = sphi 0, %s32
    %s26 = sphi 0, %s24
    %s27 = sphi 0, %s25
    %s28 = sphi 0, %s26
    %s29 = sphi 0, %s27
    %s37 = sphi 0, %s37
    %s39 = sphi 0, %s37
    %s40 = sphi 0, %s39
    %s54 = sphi 0, %s40
    %s66 = sphi 0, %s68
    %s69 = sphi 0, %s66
    %s70 = sphi 0, %s69
    %s86 = sphi 0, %s70
    %s92 = sphi 0, %s94
    %s95 = sphi 0, %s92
    %s96 = sphi 0, %s95
    %s112 = sphi 0, %s96
    %s118 = sphi 0, %s120
    %s121 = sphi 0, %s118
    %s122 = sphi 0, %s121
    %s138 = sphi 0, %s122
    %s144 = sphi 0, %s146
    %s147 = sphi 0, %s144
    %s148 = sphi 0, %s147
    %s164 = sphi 0, %s148
    %s170 = sphi 0, %s172
    %s173 = sphi 0, %s170
    %s174 = sphi 0, %s173
    %s190 = sphi 0, %s174
    %s196 = sphi 0, %s198
    %s199 = sphi 0, %s196
    %s200 = sphi 0, %s199
    %s216 = sphi 0, %s200
    %s230 = sphi 0, %s232
    %s233 = sphi 0, %s230
    %s234 = sphi 0, %s233
    %s250 = sphi 0, %s234
    %s256 = sphi 0, %s258
    %s259 = sphi 0, %s256
    %s260 = sphi 0, %s259
    %s276 = sphi 0, %s260
  $region4: #{gru_encoder_pallas.1} parent=0 // loop_header_branch
    %20 = sbr.rel (%p18) target = $region8
  $region5: #{gru_encoder_pallas.1} parent=0 // loop_body
    %s22 = ssub.s32 %s17, 1
    %s23 = ssub.s32 %s17, 2
    %s30 = sadd.s32 1, %s25
    %p31 = scmp.ge.s32.totalorder %s30, 1
    %s32 = scalar_select %p31, 0, %s30
    %s33 = sadd.s32 1, %s24
    %s34 = scalar_select %p31, %s33, %s24
    %p35 = scmp.ge.s32.totalorder %s34, 2
    %s36 = scalar_select %p35, 0, %s34
    %s38 = sadd.s32 %s37, 1
    %p41 = scmp.eq.s32.totalorder %s17, 1
    %p42 = scmp.ne.s32.totalorder %s37, %s39
    %p43 = scmp.eq.s32.totalorder %s17, 0
    %p44 = por %p42, %p43
    %p45 = scmp.ne.s32.totalorder %s37, %s39
    %p46 = scmp.eq.s32.totalorder %s22, 1
    %p47 = por %p45, %p46
    %p48 = scmp.ne.s32.totalorder %s39, %s40
    %p49 = scmp.eq.s32.totalorder %s22, 0
    %p50 = por %p48, %p49
    %p51 = scmp.ne.s32.totalorder %s39, %s40
    %p52 = scmp.eq.s32.totalorder %s23, 1
    %p53 = por %p51, %p52
    %p55 = scmp.ne.s32.totalorder %s40, %s54
    %p56 = scmp.eq.s32.totalorder %s23, 0
    %p57 = por %p55, %p56
    %p58 = scmp.eq.s32.totalorder %s24, 0
    %s59 = ssub.s32 0, %s25
    %s60 = scalar_select %p58, %s25, %s59
    %p61 = scmp.eq.s32.totalorder %s36, 0
    %s62 = ssub.s32 0, %s32
    %s63 = scalar_select %p61, %s32, %s62
    %s64 = ssub.s32 %s60, %s63
    %p65 = scmp.eq.s32.totalorder %s64, 0
    %s67 = sadd.s32 %s66, 1
    %s68 = scalar_select %p65, %s66, %s67
    %p71 = pneg %p65
    %p72 = scmp.eq.s32.totalorder %s17, 1
    %p73 = por %p71, %p72
    %p74 = scmp.ne.s32.totalorder %s66, %s69
    %p75 = scmp.eq.s32.totalorder %s17, 0
    %p76 = por %p74, %p75
    %p77 = scmp.ne.s32.totalorder %s66, %s69
    %p78 = scmp.eq.s32.totalorder %s22, 1
    %p79 = por %p77, %p78
    %p80 = scmp.ne.s32.totalorder %s69, %s70
    %p81 = scmp.eq.s32.totalorder %s22, 0
    %p82 = por %p80, %p81
    %p83 = scmp.ne.s32.totalorder %s69, %s70
    %p84 = scmp.eq.s32.totalorder %s23, 1
    %p85 = por %p83, %p84
    %p87 = scmp.ne.s32.totalorder %s70, %s86
    %p88 = scmp.eq.s32.totalorder %s23, 0
    %p89 = por %p87, %p88
    %s90 = ssub.s32 %s24, %s36
    %p91 = scmp.eq.s32.totalorder %s90, 0
    %s93 = sadd.s32 %s92, 1
    %s94 = scalar_select %p91, %s92, %s93
    %p97 = pneg %p91
    %p98 = scmp.eq.s32.totalorder %s17, 1
    %p99 = por %p97, %p98
    %p100 = scmp.ne.s32.totalorder %s92, %s95
    %p101 = scmp.eq.s32.totalorder %s17, 0
    %p102 = por %p100, %p101
    %p103 = scmp.ne.s32.totalorder %s92, %s95
    %p104 = scmp.eq.s32.totalorder %s22, 1
    %p105 = por %p103, %p104
    %p106 = scmp.ne.s32.totalorder %s95, %s96
    %p107 = scmp.eq.s32.totalorder %s22, 0
    %p108 = por %p106, %p107
    %p109 = scmp.ne.s32.totalorder %s95, %s96
    %p110 = scmp.eq.s32.totalorder %s23, 1
    %p111 = por %p109, %p110
    %p113 = scmp.ne.s32.totalorder %s96, %s112
    %p114 = scmp.eq.s32.totalorder %s23, 0
    %p115 = por %p113, %p114
    %s116 = ssub.s32 %s24, %s36
    %p117 = scmp.eq.s32.totalorder %s116, 0
    %s119 = sadd.s32 %s118, 1
    %s120 = scalar_select %p117, %s118, %s119
    %p123 = pneg %p117
    %p124 = scmp.eq.s32.totalorder %s17, 1
    %p125 = por %p123, %p124
    %p126 = scmp.ne.s32.totalorder %s118, %s121
    %p127 = scmp.eq.s32.totalorder %s17, 0
    %p128 = por %p126, %p127
    %p129 = scmp.ne.s32.totalorder %s118, %s121
    %p130 = scmp.eq.s32.totalorder %s22, 1
    %p131 = por %p129, %p130
    %p132 = scmp.ne.s32.totalorder %s121, %s122
    %p133 = scmp.eq.s32.totalorder %s22, 0
    %p134 = por %p132, %p133
    %p135 = scmp.ne.s32.totalorder %s121, %s122
    %p136 = scmp.eq.s32.totalorder %s23, 1
    %p137 = por %p135, %p136
    %p139 = scmp.ne.s32.totalorder %s122, %s138
    %p140 = scmp.eq.s32.totalorder %s23, 0
    %p141 = por %p139, %p140
    %s142 = ssub.s32 %s24, %s36
    %p143 = scmp.eq.s32.totalorder %s142, 0
    %s145 = sadd.s32 %s144, 1
    %s146 = scalar_select %p143, %s144, %s145
    %p149 = pneg %p143
    %p150 = scmp.eq.s32.totalorder %s17, 1
    %p151 = por %p149, %p150
    %p152 = scmp.ne.s32.totalorder %s144, %s147
    %p153 = scmp.eq.s32.totalorder %s17, 0
    %p154 = por %p152, %p153
    %p155 = scmp.ne.s32.totalorder %s144, %s147
    %p156 = scmp.eq.s32.totalorder %s22, 1
    %p157 = por %p155, %p156
    %p158 = scmp.ne.s32.totalorder %s147, %s148
    %p159 = scmp.eq.s32.totalorder %s22, 0
    %p160 = por %p158, %p159
    %p161 = scmp.ne.s32.totalorder %s147, %s148
    %p162 = scmp.eq.s32.totalorder %s23, 1
    %p163 = por %p161, %p162
    %p165 = scmp.ne.s32.totalorder %s148, %s164
    %p166 = scmp.eq.s32.totalorder %s23, 0
    %p167 = por %p165, %p166
    %s168 = ssub.s32 %s24, %s36
    %p169 = scmp.eq.s32.totalorder %s168, 0
    %s171 = sadd.s32 %s170, 1
    %s172 = scalar_select %p169, %s170, %s171
    %p175 = pneg %p169
    %p176 = scmp.eq.s32.totalorder %s17, 1
    %p177 = por %p175, %p176
    %p178 = scmp.ne.s32.totalorder %s170, %s173
    %p179 = scmp.eq.s32.totalorder %s17, 0
    %p180 = por %p178, %p179
    %p181 = scmp.ne.s32.totalorder %s170, %s173
    %p182 = scmp.eq.s32.totalorder %s22, 1
    %p183 = por %p181, %p182
    %p184 = scmp.ne.s32.totalorder %s173, %s174
    %p185 = scmp.eq.s32.totalorder %s22, 0
    %p186 = por %p184, %p185
    %p187 = scmp.ne.s32.totalorder %s173, %s174
    %p188 = scmp.eq.s32.totalorder %s23, 1
    %p189 = por %p187, %p188
    %p191 = scmp.ne.s32.totalorder %s174, %s190
    %p192 = scmp.eq.s32.totalorder %s23, 0
    %p193 = por %p191, %p192
    %s194 = ssub.s32 %s24, %s36
    %p195 = scmp.eq.s32.totalorder %s194, 0
    %s197 = sadd.s32 %s196, 1
    %s198 = scalar_select %p195, %s196, %s197
    %p201 = pneg %p195
    %p202 = scmp.eq.s32.totalorder %s17, 1
    %p203 = por %p201, %p202
    %p204 = scmp.ne.s32.totalorder %s196, %s199
    %p205 = scmp.eq.s32.totalorder %s17, 0
    %p206 = por %p204, %p205
    %p207 = scmp.ne.s32.totalorder %s196, %s199
    %p208 = scmp.eq.s32.totalorder %s22, 1
    %p209 = por %p207, %p208
    %p210 = scmp.ne.s32.totalorder %s199, %s200
    %p211 = scmp.eq.s32.totalorder %s22, 0
    %p212 = por %p210, %p211
    %p213 = scmp.ne.s32.totalorder %s199, %s200
    %p214 = scmp.eq.s32.totalorder %s23, 1
    %p215 = por %p213, %p214
    %p217 = scmp.ne.s32.totalorder %s200, %s216
    %p218 = scmp.eq.s32.totalorder %s23, 0
    %p219 = por %p217, %p218
    %p220 = scmp.eq.s32.totalorder %s24, 0
    %s221 = ssub.s32 0, %s25
    %s222 = scalar_select %p220, %s25, %s221
    %p223 = scmp.eq.s32.totalorder %s36, 0
    %s224 = ssub.s32 0, %s32
    %s225 = scalar_select %p223, %s32, %s224
    %s226 = ssub.s32 %s24, %s36
    %s227 = ssub.s32 %s222, %s225
    %s228 = sor.u32 %s226, %s227
    %p229 = scmp.eq.s32.totalorder %s228, 0
    %s231 = sadd.s32 %s230, 1
    %s232 = scalar_select %p229, %s230, %s231
    %p235 = pneg %p229
    %p236 = scmp.eq.s32.totalorder %s17, 1
    %p237 = por %p235, %p236
    %p238 = scmp.ne.s32.totalorder %s230, %s233
    %p239 = scmp.eq.s32.totalorder %s17, 0
    %p240 = por %p238, %p239
    %p241 = scmp.ne.s32.totalorder %s230, %s233
    %p242 = scmp.eq.s32.totalorder %s22, 1
    %p243 = por %p241, %p242
    %p244 = scmp.ne.s32.totalorder %s233, %s234
    %p245 = scmp.eq.s32.totalorder %s22, 0
    %p246 = por %p244, %p245
    %p247 = scmp.ne.s32.totalorder %s233, %s234
    %p248 = scmp.eq.s32.totalorder %s23, 1
    %p249 = por %p247, %p248
    %p251 = scmp.ne.s32.totalorder %s234, %s250
    %p252 = scmp.eq.s32.totalorder %s23, 0
    %p253 = por %p251, %p252
    %s254 = ssub.s32 %s24, %s36
    %p255 = scmp.eq.s32.totalorder %s254, 0
    %s257 = sadd.s32 %s256, 1
    %s258 = scalar_select %p255, %s256, %s257
    %p261 = pneg %p255
    %p262 = scmp.eq.s32.totalorder %s17, 1
    %p263 = por %p261, %p262
    %p264 = scmp.ne.s32.totalorder %s256, %s259
    %p265 = scmp.eq.s32.totalorder %s17, 0
    %p266 = por %p264, %p265
    %p267 = scmp.ne.s32.totalorder %s256, %s259
    %p268 = scmp.eq.s32.totalorder %s22, 1
    %p269 = por %p267, %p268
    %p270 = scmp.ne.s32.totalorder %s259, %s260
    %p271 = scmp.eq.s32.totalorder %s22, 0
    %p272 = por %p270, %p271
    %p273 = scmp.ne.s32.totalorder %s259, %s260
    %p274 = scmp.eq.s32.totalorder %s23, 1
    %p275 = por %p273, %p274
    %p277 = scmp.ne.s32.totalorder %s260, %s276
    %p278 = scmp.eq.s32.totalorder %s23, 0
    %p279 = por %p277, %p278
    %p280 = scmp.le.s32.totalorder 1, %s17
    %p281 = scmp.lt.s32.totalorder %s17, 3
    %p282 = pnand %p280, %p281
    %p283 = pneg %p282
    // Predicated region
    $region9: #{gru_encoder_pallas.1} parent=5 // pred_check
      _
    $region10: #{gru_encoder_pallas.1} parent=5 // pred_check_branch
      %285 = sbr.rel (%p282) target = $region12
    $region11: #{gru_encoder_pallas.1} parent=5 // pred_region
      %s286 = ssub.s32 %s17, 1
      // Predicated region
      $region13: #{gru_encoder_pallas.1} parent=11 // pred_check
        %p287 = pneg %p50
      $region14: #{gru_encoder_pallas.1} parent=11 // pred_check_branch
        %289 = sbr.rel (%p287) target = $region16
      $region15: #{gru_encoder_pallas.1} parent=11 // pred_region
        _
      $region16: #{gru_encoder_pallas.1} parent=11 // pred_fallthru
        _
    $region12: #{gru_encoder_pallas.1} parent=5 // pred_fallthru
      _
    %p290 = scmp.lt.s32.totalorder %s17, 2
    // Predicated region
    $region17: #{gru_encoder_pallas.1} parent=5 // pred_check
      %p291 = pneg %p290
    $region18: #{gru_encoder_pallas.1} parent=5 // pred_check_branch
      %293 = sbr.rel (%p291) target = $region20
    $region19: #{gru_encoder_pallas.1} parent=5 // pred_region
      // Predicated region
      $region21: #{gru_encoder_pallas.1} parent=19 // pred_check
        %p294 = pneg %p76
      $region22: #{gru_encoder_pallas.1} parent=19 // pred_check_branch
        %296 = sbr.rel (%p294) target = $region24
      $region23: #{gru_encoder_pallas.1} parent=19 // pred_region
        %p297 = scmp.eq.s32.totalorder %s24, 0
        %s298 = ssub.s32 0, %s25
        %s299 = scalar_select %p297, %s25, %s298
        %s300 = smul.u32 8, %s299
        %p301 = scmp.lt.s32.totalorder %s300, 7
        %s302 = scalar_select %p301, %s300, 7
        %s303 = smul.addr %s302, 2
        %s304 = smul.addr %s303, 4
        %s305 = scalar_lea.vmem %s2, %s304
        %p306 = scmp.eq.s32.totalorder %s24, 0
        %s307 = ssub.s32 0, %s25
        %s308 = scalar_select %p306, %s25, %s307
        %s309 = smul.u32 8, %s308
      $region24: #{gru_encoder_pallas.1} parent=19 // pred_fallthru
        _
      // Predicated region
      $region25: #{gru_encoder_pallas.1} parent=19 // pred_check
        %p310 = pneg %p102
      $region26: #{gru_encoder_pallas.1} parent=19 // pred_check_branch
        %312 = sbr.rel (%p310) target = $region28
      $region27: #{gru_encoder_pallas.1} parent=19 // pred_region
        %p313 = scmp.lt.s32.totalorder %s24, 1
        %s314 = scalar_select %p313, %s24, 1
        %s315 = smul.addr %s314, 2
        %s316 = smul.addr %s315, 8
        %s317 = scalar_lea.vmem %s3, %s316
      $region28: #{gru_encoder_pallas.1} parent=19 // pred_fallthru
        _
      // Predicated region
      $region29: #{gru_encoder_pallas.1} parent=19 // pred_check
        %p318 = pneg %p128
      $region30: #{gru_encoder_pallas.1} parent=19 // pred_check_branch
        %320 = sbr.rel (%p318) target = $region32
      $region31: #{gru_encoder_pallas.1} parent=19 // pred_region
        %p321 = scmp.lt.s32.totalorder %s24, 1
        %s322 = scalar_select %p321, %s24, 1
        %s323 = smul.addr %s322, 4
        %s324 = scalar_lea.vmem %s4, %s323
      $region32: #{gru_encoder_pallas.1} parent=19 // pred_fallthru
        _
      // Predicated region
      $region33: #{gru_encoder_pallas.1} parent=19 // pred_check
        %p325 = pneg %p154
      $region34: #{gru_encoder_pallas.1} parent=19 // pred_check_branch
        %327 = sbr.rel (%p325) target = $region36
      $region35: #{gru_encoder_pallas.1} parent=19 // pred_region
        %p328 = scmp.lt.s32.totalorder %s24, 1
        %s329 = scalar_select %p328, %s24, 1
        %s330 = scalar_lea.vmem %s5, %s329
      $region36: #{gru_encoder_pallas.1} parent=19 // pred_fallthru
        _
      // Predicated region
      $region37: #{gru_encoder_pallas.1} parent=19 // pred_check
        %p331 = pneg %p180
      $region38: #{gru_encoder_pallas.1} parent=19 // pred_check_branch
        %333 = sbr.rel (%p331) target = $region40
      $region39: #{gru_encoder_pallas.1} parent=19 // pred_region
        %p334 = scmp.lt.s32.totalorder %s24, 1
        %s335 = scalar_select %p334, %s24, 1
        %s336 = smul.addr %s335, 4
        %s337 = smul.addr %s336, 4
        %s338 = scalar_lea.vmem %s6, %s337
      $region40: #{gru_encoder_pallas.1} parent=19 // pred_fallthru
        _
      // Predicated region
      $region41: #{gru_encoder_pallas.1} parent=19 // pred_check
        %p339 = pneg %p206
      $region42: #{gru_encoder_pallas.1} parent=19 // pred_check_branch
        %341 = sbr.rel (%p339) target = $region44
      $region43: #{gru_encoder_pallas.1} parent=19 // pred_region
        %p342 = scmp.lt.s32.totalorder %s24, 1
        %s343 = scalar_select %p342, %s24, 1
        %s344 = scalar_lea.vmem %s7, %s343
      $region44: #{gru_encoder_pallas.1} parent=19 // pred_fallthru
        _
    $region20: #{gru_encoder_pallas.1} parent=5 // pred_fallthru
      _
    %p345 = scmp.le.s32.totalorder 1, %s17
    %p346 = scmp.lt.s32.totalorder %s17, 3
    %p347 = pnand %p345, %p346
    %p348 = pneg %p347
    // Predicated region
    $region45: #{gru_encoder_pallas.1} parent=5 // pred_check
      _
    $region46: #{gru_encoder_pallas.1} parent=5 // pred_check_branch
      %350 = sbr.rel (%p347) target = $region48
    $region47: #{gru_encoder_pallas.1} parent=5 // pred_region
      %s351 = ssub.s32 %s17, 1
      %p352 = pneg %p50
      %p353 = pneg %p47
      %p354 = scmp.eq.s32.totalorder %s26, 0
      %s355 = ssub.s32 0, %s27
      %s356 = scalar_select %p354, %s27, %s355
      %s357 = smul.u32 8, %s356
      %p358 = scmp.lt.s32.totalorder %s357, 7
      %s359 = scalar_select %p358, %s357, 7
      %s360 = smul.addr %s359, 2
      %s361 = smul.addr %s360, 4
      %s362 = scalar_lea.vmem %s2, %s361
      %p363 = pneg %p82
      %p364 = pneg %p79
      %p365 = scmp.lt.s32.totalorder %s26, 1
      %s366 = scalar_select %p365, %s26, 1
      %s367 = smul.addr %s366, 2
      %s368 = smul.addr %s367, 8
      %s369 = scalar_lea.vmem %s3, %s368
      %p370 = pneg %p108
      %p371 = pneg %p105
      %p372 = scmp.lt.s32.totalorder %s26, 1
      %s373 = scalar_select %p372, %s26, 1
      %s374 = smul.addr %s373, 4
      %s375 = scalar_lea.vmem %s4, %s374
      %p376 = pneg %p134
      %p377 = pneg %p131
      %p378 = scmp.lt.s32.totalorder %s26, 1
      %s379 = scalar_select %p378, %s26, 1
      %s380 = scalar_lea.vmem %s5, %s379
      %p381 = pneg %p160
      %p382 = pneg %p157
      %p383 = scmp.lt.s32.totalorder %s26, 1
      %s384 = scalar_select %p383, %s26, 1
      %s385 = smul.addr %s384, 4
      %s386 = smul.addr %s385, 4
      %s387 = scalar_lea.vmem %s6, %s386
      %p388 = pneg %p186
      %p389 = pneg %p183
      %p390 = scmp.lt.s32.totalorder %s26, 1
      %s391 = scalar_select %p390, %s26, 1
      %s392 = scalar_lea.vmem %s7, %s391
      %p393 = pneg %p212
      %p394 = pneg %p209
      %p395 = pneg %p246
      %p396 = pneg %p243
      %p397 = scmp.eq.s32.totalorder %s26, 0
      %s398 = ssub.s32 0, %s27
      %s399 = scalar_select %p397, %s27, %s398
      %s400 = smul.u32 8, %s399
      %p401 = scmp.lt.s32.totalorder %s26, 1
      %s402 = scalar_select %p401, %s26, 1
      %p403 = scmp.lt.s32.totalorder %s400, 7
      %s404 = scalar_select %p403, %s400, 7
      %s405 = smul.addr %s404, 2
      %s406 = smul.addr %s402, 16
      %s407 = sadd.s32 %s405, %s406
      %s408 = smul.addr %s407, 8
      %s409 = scalar_lea.vmem %s8, %s408
      %p410 = pneg %p272
      %p411 = pneg %p269
      %p412 = scmp.lt.s32.totalorder %s26, 1
      %s413 = scalar_select %p412, %s26, 1
      %s414 = smul.addr %s413, 2
      %s415 = smul.addr %s414, 8
      %s416 = scalar_lea.vmem %s9, %s415
      %p417 = scmp.eq.s32.totalorder %s26, 0
      %s418 = ssub.s32 0, %s27
      %s419 = scalar_select %p417, %s27, %s418
      %s420 = smul.u32 8, %s419
      %p421 = scmp.lt.s32.totalorder %s420, 7
      %s422 = scalar_select %p421, %s420, 7
      %s423 = smul.addr %s422, 2
      %s424 = smul.addr %s423, 4
      %s425 = scalar_lea.vmem %s2, %s424
      %p426 = scmp.eq.s32.totalorder %s26, 0
      %s427 = ssub.s32 0, %s27
      %s428 = scalar_select %p426, %s27, %s427
      %s429 = smul.u32 8, %s428
      %p430 = scmp.lt.s32.totalorder %s26, 1
      %s431 = scalar_select %p430, %s26, 1
      %s432 = smul.addr %s431, 2
      %s433 = smul.addr %s432, 8
      %s434 = scalar_lea.vmem %s3, %s433
      %p435 = scmp.lt.s32.totalorder %s26, 1
      %s436 = scalar_select %p435, %s26, 1
      %s437 = smul.addr %s436, 4
      %s438 = scalar_lea.vmem %s4, %s437
      %p439 = scmp.lt.s32.totalorder %s26, 1
      %s440 = scalar_select %p439, %s26, 1
      %s441 = scalar_lea.vmem %s5, %s440
      %p442 = scmp.lt.s32.totalorder %s26, 1
      %s443 = scalar_select %p442, %s26, 1
      %s444 = smul.addr %s443, 4
      %s445 = smul.addr %s444, 4
      %s446 = scalar_lea.vmem %s6, %s445
      %p447 = scmp.lt.s32.totalorder %s26, 1
      %s448 = scalar_select %p447, %s26, 1
      %s449 = scalar_lea.vmem %s7, %s448
      %p450 = scmp.eq.s32.totalorder %s26, 0
      %s451 = ssub.s32 0, %s27
      %s452 = scalar_select %p450, %s27, %s451
      %s453 = smul.u32 8, %s452
      %p454 = scmp.lt.s32.totalorder %s26, 1
      %s455 = scalar_select %p454, %s26, 1
      %p456 = scmp.lt.s32.totalorder %s453, 7
      %s457 = scalar_select %p456, %s453, 7
      %s458 = smul.addr %s457, 2
      %s459 = smul.addr %s455, 16
      %s460 = sadd.s32 %s458, %s459
      %s461 = smul.addr %s460, 8
      %s462 = scalar_lea.vmem %s8, %s461
      %p463 = scmp.eq.s32.totalorder %s26, 0
      %s464 = ssub.s32 0, %s27
      %s465 = scalar_select %p463, %s27, %s464
      %s466 = smul.u32 8, %s465
      %p467 = scmp.lt.s32.totalorder %s26, 1
      %s468 = scalar_select %p467, %s26, 1
      %s469 = smul.addr %s468, 2
      %s470 = smul.addr %s469, 8
      %s471 = scalar_lea.vmem %s9, %s470
      %p473 = scmp.eq.s32.totalorder %s26, 0
      %s474 = ssub.s32 0, %s27
      %s475 = scalar_select %p473, %s27, %s474
      %s476 = smul.u32 %s475, 8
      %p477 = scmp.eq.s32.totalorder %s27, 0
      // Predicated region
      $region49: #{gru_encoder_pallas.1} parent=47 // pred_check
        %p478 = pneg %p477
      $region50: #{gru_encoder_pallas.1} parent=47 // pred_check_branch
        %480 = sbr.rel (%p478) target = $region52
      $region51: #{gru_encoder_pallas.1} parent=47 // pred_region
        %v481 = vld [vmem:[%s434] sm:$0xff]
        %v482 = vld [vmem:[%s434 + $0x8] sm:$0xff]
        %vm483 = vcmask 261120
        %484 = vst.msk [vmem:[#allocation3] sm:$0xff] %vm483, %v481
        %485 = vst.msk [vmem:[#allocation3 + $0x8] sm:$0xff] %vm483, %v482
      $region52: #{gru_encoder_pallas.1} parent=47 // pred_fallthru
        _
      %s486 = sld [smem:[#allocation5]]
      %p487 = scmp.lt.s32.totalorder %s476, %s486
      // Predicated region
      $region53: #{gru_encoder_pallas.1} parent=47 // pred_check
        %p488 = pneg %p487
      $region54: #{gru_encoder_pallas.1} parent=47 // pred_check_branch
        %490 = sbr.rel (%p488) target = $region56
      $region55: #{gru_encoder_pallas.1} parent=47 // pred_region
        %v491 = vld [vmem:[%s425] sm:$0xf]
        %v492 = vld [vmem:[%s425 + $0x4] sm:$0xf]
        %v493 = vld [vmem:[%s425 + $0x8] sm:$0xf]
        %v494 = vld [vmem:[%s425 + $0xc] sm:$0xf]
        %v495 = vld [vmem:[%s425 + $0x10] sm:$0xf]
        %v496 = vld [vmem:[%s425 + $0x14] sm:$0xf]
        %v497 = vld [vmem:[%s425 + $0x18] sm:$0xf]
        %v498 = vld [vmem:[%s425 + $0x1c] sm:$0xf]
        %v499 = vld [vmem:[%s425 + $0x20] sm:$0xf]
        %v500 = vld [vmem:[%s425 + $0x24] sm:$0xf]
        %v501 = vld [vmem:[%s425 + $0x28] sm:$0xf]
        %v502 = vld [vmem:[%s425 + $0x2c] sm:$0xf]
        %v503 = vld [vmem:[%s425 + $0x30] sm:$0xf]
        %v504 = vld [vmem:[%s425 + $0x34] sm:$0xf]
        %v505 = vld [vmem:[%s425 + $0x38] sm:$0xf]
        %v506 = vld [vmem:[%s425 + $0x3c] sm:$0xf]
        %v507 = vld [vmem:[%s438] sm:$0xf]
        %v524 = vunpack.c.l.b16 %v491
        %v525 = vunpack.c.l.b16 %v492
        %v526 = vunpack.c.l.b16 %v493
        %v527 = vunpack.c.l.b16 %v494
        %v528 = vunpack.c.l.b16 %v495
        %v529 = vunpack.c.l.b16 %v496
        %v530 = vunpack.c.l.b16 %v497
        %v531 = vunpack.c.l.b16 %v498
        %v532 = vunpack.c.l.b16 %v499
        %v533 = vunpack.c.l.b16 %v500
        %v534 = vunpack.c.l.b16 %v501
        %v535 = vunpack.c.l.b16 %v502
        %v536 = vunpack.c.l.b16 %v503
        %v537 = vunpack.c.l.b16 %v504
        %v538 = vunpack.c.l.b16 %v505
        %v539 = vunpack.c.l.b16 %v506
        %v540 = vpack.c.b16 %v525, %v524
        %v541 = vpack.c.b16 %v527, %v526
        %v542 = vpack.c.b16 %v529, %v528
        %v543 = vpack.c.b16 %v531, %v530
        %v544 = vpack.c.b16 %v533, %v532
        %v545 = vpack.c.b16 %v535, %v534
        %v546 = vpack.c.b16 %v537, %v536
        %v547 = vpack.c.b16 %v539, %v538
        %vm548 = vcmask 64512
        %v550 = vsel %vm548, %v540, 0
        %v553 = vsel %vm548, %v541, 0
        %v556 = vsel %vm548, %v542, 0
        %v559 = vsel %vm548, %v543, 0
        %v562 = vsel %vm548, %v544, 0
        %v565 = vsel %vm548, %v545, 0
        %v568 = vsel %vm548, %v546, 0
        %v571 = vsel %vm548, %v547, 0
        %vm573 = vcmask 1043456
        %v575 = vsel %vm573, %v507, 0
        %577 = vmatpush.bf16.msra.mxu0 0
        %578 = vmatpush.bf16.msra.mxu0 0
        %579 = vmatpush.bf16.msra.mxu0 0
        %580 = vmatpush.bf16.msra.mxu0 0
        %581 = vmatpush.bf16.msra.mxu0 0
        %582 = vmatpush.bf16.msra.mxu0 0
        %583 = vmatpush.bf16.msra.mxu0 0
        %584 = vmatpush.bf16.msra.mxu0 %v575
        %585 = vmatmul.bf16.gmra.mxu0 %v550
        %v586 = vpop.f32.mrf.mxu0
        %v587 = vadd.f32 0.0, %v586
        %v588 = vpop.f32.mrf.mxu0
        %v589 = vadd.f32 0.0, %v588
        %590 = vmatmul.bf16.gmra.mxu0 %v553
        %v591 = vpop.f32.mrf.mxu0
        %v592 = vadd.f32 0.0, %v591
        %v593 = vpop.f32.mrf.mxu0
        %v594 = vadd.f32 0.0, %v593
        %595 = vmatmul.bf16.gmra.mxu0 %v556
        %v596 = vpop.f32.mrf.mxu0
        %v597 = vadd.f32 0.0, %v596
        %v598 = vpop.f32.mrf.mxu0
        %v599 = vadd.f32 0.0, %v598
        %600 = vmatmul.bf16.gmra.mxu0 %v559
        %v601 = vpop.f32.mrf.mxu0
        %v602 = vadd.f32 0.0, %v601
        %v603 = vpop.f32.mrf.mxu0
        %v604 = vadd.f32 0.0, %v603
        %605 = vmatmul.bf16.gmra.mxu0 %v562
        %v606 = vpop.f32.mrf.mxu0
        %v607 = vadd.f32 0.0, %v606
        %v608 = vpop.f32.mrf.mxu0
        %v609 = vadd.f32 0.0, %v608
        %610 = vmatmul.bf16.gmra.mxu0 %v565
        %v611 = vpop.f32.mrf.mxu0
        %v612 = vadd.f32 0.0, %v611
        %v613 = vpop.f32.mrf.mxu0
        %v614 = vadd.f32 0.0, %v613
        %615 = vmatmul.bf16.gmra.mxu0 %v568
        %v616 = vpop.f32.mrf.mxu0
        %v617 = vadd.f32 0.0, %v616
        %v618 = vpop.f32.mrf.mxu0
        %v619 = vadd.f32 0.0, %v618
        %620 = vmatmul.bf16.gmra.mxu0 %v571
        %v621 = vpop.f32.mrf.mxu0
        %v622 = vadd.f32 0.0, %v621
        %v623 = vpop.f32.mrf.mxu0
        %v624 = vadd.f32 0.0, %v623
        %625 = vdwg.mxu0
        %v626 = vld [vmem:[%s441] sm:$0x1]
        %v628 = vperm.slane %v626, 0
        %v630 = vadd.f32 %v587, %v628
        %v631 = vadd.f32 %v589, %v628
        %v632 = vadd.f32 %v592, %v628
        %v633 = vadd.f32 %v594, %v628
        %v634 = vadd.f32 %v597, %v628
        %v635 = vadd.f32 %v599, %v628
        %v636 = vadd.f32 %v602, %v628
        %v637 = vadd.f32 %v604, %v628
        %v638 = vadd.f32 %v607, %v628
        %v639 = vadd.f32 %v609, %v628
        %v640 = vadd.f32 %v612, %v628
        %v641 = vadd.f32 %v614, %v628
        %v642 = vadd.f32 %v617, %v628
        %v643 = vadd.f32 %v619, %v628
        %v644 = vadd.f32 %v622, %v628
        %v645 = vadd.f32 %v624, %v628
        %vm646 = vcmask 785408
        %647 = vst.msk [vmem:[#allocation2] sm:$0xff] %vm646, %v630
        %648 = vst.msk [vmem:[#allocation2 + $0x8] sm:$0xff] %vm646, %v631
        %649 = vst.msk [vmem:[#allocation2 + $0x10] sm:$0xff] %vm646, %v632
        %650 = vst.msk [vmem:[#allocation2 + $0x18] sm:$0xff] %vm646, %v633
        %651 = vst.msk [vmem:[#allocation2 + $0x20] sm:$0xff] %vm646, %v634
        %652 = vst.msk [vmem:[#allocation2 + $0x28] sm:$0xff] %vm646, %v635
        %653 = vst.msk [vmem:[#allocation2 + $0x30] sm:$0xff] %vm646, %v636
        %654 = vst.msk [vmem:[#allocation2 + $0x38] sm:$0xff] %vm646, %v637
        %655 = vst.msk [vmem:[#allocation2 + $0x40] sm:$0xff] %vm646, %v638
        %656 = vst.msk [vmem:[#allocation2 + $0x48] sm:$0xff] %vm646, %v639
        %657 = vst.msk [vmem:[#allocation2 + $0x50] sm:$0xff] %vm646, %v640
        %658 = vst.msk [vmem:[#allocation2 + $0x58] sm:$0xff] %vm646, %v641
        %659 = vst.msk [vmem:[#allocation2 + $0x60] sm:$0xff] %vm646, %v642
        %660 = vst.msk [vmem:[#allocation2 + $0x68] sm:$0xff] %vm646, %v643
        %661 = vst.msk [vmem:[#allocation2 + $0x70] sm:$0xff] %vm646, %v644
        %662 = vst.msk [vmem:[#allocation2 + $0x78] sm:$0xff] %vm646, %v645
        %v663 = vld [vmem:[%s1] sm:$0xff]
        %v664 = vld [vmem:[%s1 + $0x8] sm:$0xff]
        %v665 = vld [vmem:[%s446] sm:$0xf]
        %v666 = vld [vmem:[%s446 + $0x4] sm:$0xf]
        %v667 = vld [vmem:[%s446 + $0x8] sm:$0xf]
        %v668 = vld [vmem:[%s446 + $0xc] sm:$0xf]
        %v669 = vld [vmem:[%s449] sm:$0x1]
        %v670 = vld [vmem:[#allocation3] sm:$0xff]
        %v671 = vld [vmem:[#allocation3 + $0x8] sm:$0xff]
        %s672 = scalar_select %p473, 0, 7
        %s673 = smul.u32 %s672, 16
        %s674 = scalar_lea.vmem [#allocation2], %s673
        %v675 = vld [vmem:[%s674] sm:$0xff]
        %v676 = vld [vmem:[%s674 + $0x8] sm:$0xff]
        %v677 = vpack.c.bf16 %v671, %v670
        %v679 = vperm.slane %v669, 0
        %v685 = vunpack.c.l.b16 %v665
        %v686 = vunpack.c.l.b16 %v666
        %v687 = vunpack.c.l.b16 %v667
        %v688 = vunpack.c.l.b16 %v668
        %v689 = vpack.c.b16 %v686, %v685
        %v690 = vpack.c.b16 %v688, %v687
        %vm693 = vcmask 261120
        %v695 = vsel %vm693, %v677, 0
        %697 = vmatpush.bf16.msra.mxu0 0
        %698 = vmatpush.bf16.msra.mxu0 0
        %699 = vmatpush.bf16.msra.mxu0 0
        %700 = vmatpush.bf16.msra.mxu0 0
        %701 = vmatpush.bf16.msra.mxu0 0
        %702 = vmatpush.bf16.msra.mxu0 0
        %703 = vmatpush.bf16.msra.mxu0 %v690
        %704 = vmatpush.bf16.msra.mxu0 %v689
        %705 = vmatmul.bf16.gmra.mxu0 %v695
        %v706 = vpop.f32.mrf.mxu0
        %v707 = vadd.f32 %v679, %v706
        %v708 = vpop.f32.mrf.mxu0
        %v709 = vadd.f32 %v679, %v708
        %710 = vdwg.mxu0
        %v711 = vadd.f32 %v675, %v707
        %v712 = vadd.f32 %v676, %v709
        %v713 = vxor.u32 %v711, 2147483648
        %v714 = vxor.u32 %v712, 2147483648
        %v715 = vmul.f32 %v713, 1.442695
        %v716 = vpow.pop %v715
        %v717 = vmul.f32 %v714, 1.442695
        %v718 = vpow.pop %v717
        %v719 = vadd.f32 %v716, 1.0
        %v720 = vadd.f32 %v718, 1.0
        %v721 = vrcp.pop %v719
        %v722 = vmul.f32 %v719, %v721
        %v723 = vsub.f32 1.0, %v722
        %v724 = vmul.f32 %v721, %v723
        %v725 = vadd.f32 %v721, %v724
        %vm726 = vweird.f32 %v719
        %vm727 = vweird.f32 %v721
        %vm728 = vmor %vm726, %vm727
        %v729 = vsel %vm728, %v721, %v725
        %v730 = vand.u32 2147483647, %v719
        %vm731 = vcmp.eq.f32.partialorder %v730, 8.507059e+37
        %v732 = vand.u32 %v719, 2147483648
        %v733 = vor.u32 1.1754944e-38, %v732
        %v734 = vsel %vm731, %v733, %v729
        %v735 = vmul.f32 1.0, %v734
        %v736 = vrcp.pop %v720
        %v737 = vmul.f32 %v720, %v736
        %v738 = vsub.f32 1.0, %v737
        %v739 = vmul.f32 %v736, %v738
        %v740 = vadd.f32 %v736, %v739
        %vm741 = vweird.f32 %v720
        %vm742 = vweird.f32 %v736
        %vm743 = vmor %vm741, %vm742
        %v744 = vsel %vm743, %v736, %v740
        %v745 = vand.u32 2147483647, %v720
        %vm746 = vcmp.eq.f32.partialorder %v745, 8.507059e+37
        %v747 = vand.u32 %v720, 2147483648
        %v748 = vor.u32 1.1754944e-38, %v747
        %v749 = vsel %vm746, %v748, %v744
        %v750 = vmul.f32 1.0, %v749
        %753 = vrot.lane.b32.xlu0 %v707, 64
        %v754 = vpop.permute.xlu0 %753
        %755 = vrot.lane.b32.xlu0 %v709, 64
        %v756 = vpop.permute.xlu0 %755
        %v759 = vmul.f32 %v735, %v754
        %v760 = vmul.f32 %v750, %v756
        %763 = vrot.lane.b32.xlu0 %v759, 64
        %v764 = vpop.permute.xlu0 %763
        %765 = vrot.lane.b32.xlu0 %v760, 64
        %v766 = vpop.permute.xlu0 %765
        %v769 = vadd.f32 %v675, %v764
        %v770 = vadd.f32 %v676, %v766
        %v771 = vtanh.pop %v769
        %v772 = vtanh.pop %v770
        %775 = vrot.lane.b32.xlu0 %v771, 64
        %v776 = vpop.permute.xlu0 %775
        %777 = vrot.lane.b32.xlu0 %v772, 64
        %v778 = vpop.permute.xlu0 %777
        %v781 = vsub.f32 %v670, %v776
        %v782 = vsub.f32 %v671, %v778
        %785 = vrot.lane.b32.xlu0 %v781, 32
        %v786 = vpop.permute.xlu0 %785
        %787 = vrot.lane.b32.xlu0 %v782, 32
        %v788 = vpop.permute.xlu0 %787
        %v791 = vmul.f32 %v735, %v786
        %v792 = vmul.f32 %v750, %v788
        %795 = vrot.lane.b32.xlu0 %v791, 32
        %v796 = vpop.permute.xlu0 %795
        %797 = vrot.lane.b32.xlu0 %v792, 32
        %v798 = vpop.permute.xlu0 %797
        %v801 = vadd.f32 %v771, %v796
        %v802 = vadd.f32 %v772, %v798
        %s803 = sadd.s32 %s476, %s672
        %v804 = vstv %s803
        %vm805 = vcmp.lt.s32.totalorder %v804, %v663
        %vm806 = vcmp.lt.s32.totalorder %v804, %v664
        %v807 = vsel %vm805, 1, 0
        %v808 = vsel %vm806, 1, 0
        %809 = vset.pattern.permute.xlu0 0
        %810 = vperm.xlu0 %809, %v807
        %v811 = vpop.permute.xlu0 %810
        %812 = vset.pattern.permute.xlu0 0
        %813 = vperm.xlu0 %812, %v808
        %v814 = vpop.permute.xlu0 %813
        %vm815 = vcmp.eq.s32.totalorder %v811, 1
        %vm816 = vcmp.eq.s32.totalorder %v814, 1
        %v817 = vsel %vm815, %v801, 0.0
        %v818 = vsel %vm816, %v802, 0.0
        %821 = vrot.lane.b32.xlu0 %v817, 64
        %v822 = vpop.permute.xlu0 %821
        %823 = vrot.lane.b32.xlu0 %v818, 64
        %v824 = vpop.permute.xlu0 %823
        %s827 = scalar_lea.vmem %s462, %s673
        %828 = vst.msk [vmem:[%s827] sm:$0xff] %vm693, %v822
        %829 = vst.msk [vmem:[%s827 + $0x8] sm:$0xff] %vm693, %v824
        %832 = vrot.lane.b32.xlu0 %v670, 64
        %v833 = vpop.permute.xlu0 %832
        %834 = vrot.lane.b32.xlu0 %v671, 64
        %v835 = vpop.permute.xlu0 %834
        %v838 = vsel %vm815, %v801, %v833
        %v839 = vsel %vm816, %v802, %v835
        %s840 = scalar_select %p473, 1, 6
        %s841 = smul.u32 %s840, 16
        %s842 = scalar_lea.vmem [#allocation2], %s841
        %v843 = vld [vmem:[%s842] sm:$0xff]
        %v844 = vld [vmem:[%s842 + $0x8] sm:$0xff]
        %v845 = vpack.c.bf16 %v839, %v838
        %847 = vrot.lane.b32.xlu0 %v845, 64
        %v848 = vpop.permute.xlu0 %847
        %v850 = vsel %vm693, %v848, 0
        %852 = vmatpush.bf16.msra.mxu0 0
        %853 = vmatpush.bf16.msra.mxu0 0
        %854 = vmatpush.bf16.msra.mxu0 0
        %855 = vmatpush.bf16.msra.mxu0 0
        %856 = vmatpush.bf16.msra.mxu0 0
        %857 = vmatpush.bf16.msra.mxu0 0
        %858 = vmatpush.bf16.msra.mxu0 %v690
        %859 = vmatpush.bf16.msra.mxu0 %v689
        %860 = vmatmul.bf16.gmra.mxu0 %v850
        %v861 = vpop.f32.mrf.mxu0
        %v862 = vadd.f32 %v679, %v861
        %v863 = vpop.f32.mrf.mxu0
        %v864 = vadd.f32 %v679, %v863
        %865 = vdwg.mxu0
        %v866 = vadd.f32 %v843, %v862
        %v867 = vadd.f32 %v844, %v864
        %v868 = vxor.u32 %v866, 2147483648
        %v869 = vxor.u32 %v867, 2147483648
        %v870 = vmul.f32 %v868, 1.442695
        %v871 = vpow.pop %v870
        %v872 = vmul.f32 %v869, 1.442695
        %v873 = vpow.pop %v872
        %v874 = vadd.f32 %v871, 1.0
        %v875 = vadd.f32 %v873, 1.0
        %v876 = vrcp.pop %v874
        %v877 = vmul.f32 %v874, %v876
        %v878 = vsub.f32 1.0, %v877
        %v879 = vmul.f32 %v876, %v878
        %v880 = vadd.f32 %v876, %v879
        %vm881 = vweird.f32 %v874
        %vm882 = vweird.f32 %v876
        %vm883 = vmor %vm881, %vm882
        %v884 = vsel %vm883, %v876, %v880
        %v885 = vand.u32 2147483647, %v874
        %vm886 = vcmp.eq.f32.partialorder %v885, 8.507059e+37
        %v887 = vand.u32 %v874, 2147483648
        %v888 = vor.u32 1.1754944e-38, %v887
        %v889 = vsel %vm886, %v888, %v884
        %v890 = vmul.f32 1.0, %v889
        %v891 = vrcp.pop %v875
        %v892 = vmul.f32 %v875, %v891
        %v893 = vsub.f32 1.0, %v892
        %v894 = vmul.f32 %v891, %v893
        %v895 = vadd.f32 %v891, %v894
        %vm896 = vweird.f32 %v875
        %vm897 = vweird.f32 %v891
        %vm898 = vmor %vm896, %vm897
        %v899 = vsel %vm898, %v891, %v895
        %v900 = vand.u32 2147483647, %v875
        %vm901 = vcmp.eq.f32.partialorder %v900, 8.507059e+37
        %v902 = vand.u32 %v875, 2147483648
        %v903 = vor.u32 1.1754944e-38, %v902
        %v904 = vsel %vm901, %v903, %v899
        %v905 = vmul.f32 1.0, %v904
        %908 = vrot.lane.b32.xlu0 %v862, 64
        %v909 = vpop.permute.xlu0 %908
        %910 = vrot.lane.b32.xlu0 %v864, 64
        %v911 = vpop.permute.xlu0 %910
        %v914 = vmul.f32 %v890, %v909
        %v915 = vmul.f32 %v905, %v911
        %918 = vrot.lane.b32.xlu0 %v914, 64
        %v919 = vpop.permute.xlu0 %918
        %920 = vrot.lane.b32.xlu0 %v915, 64
        %v921 = vpop.permute.xlu0 %920
        %v924 = vadd.f32 %v843, %v919
        %v925 = vadd.f32 %v844, %v921
        %v926 = vtanh.pop %v924
        %v927 = vtanh.pop %v925
        %v928 = vsub.f32 %v838, %v926
        %v929 = vsub.f32 %v839, %v927
        %932 = vrot.lane.b32.xlu0 %v928, 96
        %v933 = vpop.permute.xlu0 %932
        %934 = vrot.lane.b32.xlu0 %v929, 96
        %v935 = vpop.permute.xlu0 %934
        %v938 = vmul.f32 %v890, %v933
        %v939 = vmul.f32 %v905, %v935
        %942 = vrot.lane.b32.xlu0 %v938, 32
        %v943 = vpop.permute.xlu0 %942
        %944 = vrot.lane.b32.xlu0 %v939, 32
        %v945 = vpop.permute.xlu0 %944
        %v948 = vadd.f32 %v926, %v943
        %v949 = vadd.f32 %v927, %v945
        %s950 = sadd.s32 %s476, %s840
        %v951 = vstv %s950
        %vm952 = vcmp.lt.s32.totalorder %v951, %v663
        %vm953 = vcmp.lt.s32.totalorder %v951, %v664
        %v954 = vsel %vm952, 1, 0
        %v955 = vsel %vm953, 1, 0
        %956 = vset.pattern.permute.xlu0 0
        %957 = vperm.xlu0 %956, %v954
        %v958 = vpop.permute.xlu0 %957
        %959 = vset.pattern.permute.xlu0 0
        %960 = vperm.xlu0 %959, %v955
        %v961 = vpop.permute.xlu0 %960
        %vm962 = vcmp.eq.s32.totalorder %v958, 1
        %vm963 = vcmp.eq.s32.totalorder %v961, 1
        %v964 = vsel %vm962, %v948, 0.0
        %v965 = vsel %vm963, %v949, 0.0
        %968 = vrot.lane.b32.xlu0 %v964, 64
        %v969 = vpop.permute.xlu0 %968
        %970 = vrot.lane.b32.xlu0 %v965, 64
        %v971 = vpop.permute.xlu0 %970
        %s974 = scalar_lea.vmem %s462, %s841
        %975 = vst.msk [vmem:[%s974] sm:$0xff] %vm693, %v969
        %976 = vst.msk [vmem:[%s974 + $0x8] sm:$0xff] %vm693, %v971
        %v977 = vsel %vm962, %v948, %v838
        %v978 = vsel %vm963, %v949, %v839
        %s979 = scalar_select %p473, 2, 5
        %s980 = smul.u32 %s979, 16
        %s981 = scalar_lea.vmem [#allocation2], %s980
        %v982 = vld [vmem:[%s981] sm:$0xff]
        %v983 = vld [vmem:[%s981 + $0x8] sm:$0xff]
        %v984 = vpack.c.bf16 %v978, %v977
        %986 = vrot.lane.b32.xlu0 %v984, 64
        %v987 = vpop.permute.xlu0 %986
        %v989 = vsel %vm693, %v987, 0
        %991 = vmatpush.bf16.msra.mxu0 0
        %992 = vmatpush.bf16.msra.mxu0 0
        %993 = vmatpush.bf16.msra.mxu0 0
        %994 = vmatpush.bf16.msra.mxu0 0
        %995 = vmatpush.bf16.msra.mxu0 0
        %996 = vmatpush.bf16.msra.mxu0 0
        %997 = vmatpush.bf16.msra.mxu0 %v690
        %998 = vmatpush.bf16.msra.mxu0 %v689
        %999 = vmatmul.bf16.gmra.mxu0 %v989
        %v1000 = vpop.f32.mrf.mxu0
        %v1001 = vadd.f32 %v679, %v1000
        %v1002 = vpop.f32.mrf.mxu0
        %v1003 = vadd.f32 %v679, %v1002
        %1004 = vdwg.mxu0
        %v1005 = vadd.f32 %v982, %v1001
        %v1006 = vadd.f32 %v983, %v1003
        %v1007 = vxor.u32 %v1005, 2147483648
        %v1008 = vxor.u32 %v1006, 2147483648
        %v1009 = vmul.f32 %v1007, 1.442695
        %v1010 = vpow.pop %v1009
        %v1011 = vmul.f32 %v1008, 1.442695
        %v1012 = vpow.pop %v1011
        %v1013 = vadd.f32 %v1010, 1.0
        %v1014 = vadd.f32 %v1012, 1.0
        %v1015 = vrcp.pop %v1013
        %v1016 = vmul.f32 %v1013, %v1015
        %v1017 = vsub.f32 1.0, %v1016
        %v1018 = vmul.f32 %v1015, %v1017
        %v1019 = vadd.f32 %v1015, %v1018
        %vm1020 = vweird.f32 %v1013
        %vm1021 = vweird.f32 %v1015
        %vm1022 = vmor %vm1020, %vm1021
        %v1023 = vsel %vm1022, %v1015, %v1019
        %v1024 = vand.u32 2147483647, %v1013
        %vm1025 = vcmp.eq.f32.partialorder %v1024, 8.507059e+37
        %v1026 = vand.u32 %v1013, 2147483648
        %v1027 = vor.u32 1.1754944e-38, %v1026
        %v1028 = vsel %vm1025, %v1027, %v1023
        %v1029 = vmul.f32 1.0, %v1028
        %v1030 = vrcp.pop %v1014
        %v1031 = vmul.f32 %v1014, %v1030
        %v1032 = vsub.f32 1.0, %v1031
        %v1033 = vmul.f32 %v1030, %v1032
        %v1034 = vadd.f32 %v1030, %v1033
        %vm1035 = vweird.f32 %v1014
        %vm1036 = vweird.f32 %v1030
        %vm1037 = vmor %vm1035, %vm1036
        %v1038 = vsel %vm1037, %v1030, %v1034
        %v1039 = vand.u32 2147483647, %v1014
        %vm1040 = vcmp.eq.f32.partialorder %v1039, 8.507059e+37
        %v1041 = vand.u32 %v1014, 2147483648
        %v1042 = vor.u32 1.1754944e-38, %v1041
        %v1043 = vsel %vm1040, %v1042, %v1038
        %v1044 = vmul.f32 1.0, %v1043
        %1047 = vrot.lane.b32.xlu0 %v1001, 64
        %v1048 = vpop.permute.xlu0 %1047
        %1049 = vrot.lane.b32.xlu0 %v1003, 64
        %v1050 = vpop.permute.xlu0 %1049
        %v1053 = vmul.f32 %v1029, %v1048
        %v1054 = vmul.f32 %v1044, %v1050
        %1057 = vrot.lane.b32.xlu0 %v1053, 64
        %v1058 = vpop.permute.xlu0 %1057
        %1059 = vrot.lane.b32.xlu0 %v1054, 64
        %v1060 = vpop.permute.xlu0 %1059
        %v1063 = vadd.f32 %v982, %v1058
        %v1064 = vadd.f32 %v983, %v1060
        %v1065 = vtanh.pop %v1063
        %v1066 = vtanh.pop %v1064
        %v1067 = vsub.f32 %v977, %v1065
        %v1068 = vsub.f32 %v978, %v1066
        %1071 = vrot.lane.b32.xlu0 %v1067, 96
        %v1072 = vpop.permute.xlu0 %1071
        %1073 = vrot.lane.b32.xlu0 %v1068, 96
        %v1074 = vpop.permute.xlu0 %1073
        %v1077 = vmul.f32 %v1029, %v1072
        %v1078 = vmul.f32 %v1044, %v1074
        %1081 = vrot.lane.b32.xlu0 %v1077, 32
        %v1082 = vpop.permute.xlu0 %1081
        %1083 = vrot.lane.b32.xlu0 %v1078, 32
        %v1084 = vpop.permute.xlu0 %1083
        %v1087 = vadd.f32 %v1065, %v1082
        %v1088 = vadd.f32 %v1066, %v1084
        %s1089 = sadd.s32 %s476, %s979
        %v1090 = vstv %s1089
        %vm1091 = vcmp.lt.s32.totalorder %v1090, %v663
        %vm1092 = vcmp.lt.s32.totalorder %v1090, %v664
        %v1093 = vsel %vm1091, 1, 0
        %v1094 = vsel %vm1092, 1, 0
        %1095 = vset.pattern.permute.xlu0 0
        %1096 = vperm.xlu0 %1095, %v1093
        %v1097 = vpop.permute.xlu0 %1096
        %1098 = vset.pattern.permute.xlu0 0
        %1099 = vperm.xlu0 %1098, %v1094
        %v1100 = vpop.permute.xlu0 %1099
        %vm1101 = vcmp.eq.s32.totalorder %v1097, 1
        %vm1102 = vcmp.eq.s32.totalorder %v1100, 1
        %v1103 = vsel %vm1101, %v1087, 0.0
        %v1104 = vsel %vm1102, %v1088, 0.0
        %1107 = vrot.lane.b32.xlu0 %v1103, 64
        %v1108 = vpop.permute.xlu0 %1107
        %1109 = vrot.lane.b32.xlu0 %v1104, 64
        %v1110 = vpop.permute.xlu0 %1109
        %s1113 = scalar_lea.vmem %s462, %s980
        %1114 = vst.msk [vmem:[%s1113] sm:$0xff] %vm693, %v1108
        %1115 = vst.msk [vmem:[%s1113 + $0x8] sm:$0xff] %vm693, %v1110
        %v1116 = vsel %vm1101, %v1087, %v977
        %v1117 = vsel %vm1102, %v1088, %v978
        %s1118 = scalar_select %p473, 3, 4
        %s1119 = smul.u32 %s1118, 16
        %s1120 = scalar_lea.vmem [#allocation2], %s1119
        %v1121 = vld [vmem:[%s1120] sm:$0xff]
        %v1122 = vld [vmem:[%s1120 + $0x8] sm:$0xff]
        %v1123 = vpack.c.bf16 %v1117, %v1116
        %1125 = vrot.lane.b32.xlu0 %v1123, 64
        %v1126 = vpop.permute.xlu0 %1125
        %v1128 = vsel %vm693, %v1126, 0
        %1130 = vmatpush.bf16.msra.mxu0 0
        %1131 = vmatpush.bf16.msra.mxu0 0
        %1132 = vmatpush.bf16.msra.mxu0 0
        %1133 = vmatpush.bf16.msra.mxu0 0
        %1134 = vmatpush.bf16.msra.mxu0 0
        %1135 = vmatpush.bf16.msra.mxu0 0
        %1136 = vmatpush.bf16.msra.mxu0 %v690
        %1137 = vmatpush.bf16.msra.mxu0 %v689
        %1138 = vmatmul.bf16.gmra.mxu0 %v1128
        %v1139 = vpop.f32.mrf.mxu0
        %v1140 = vadd.f32 %v679, %v1139
        %v1141 = vpop.f32.mrf.mxu0
        %v1142 = vadd.f32 %v679, %v1141
        %1143 = vdwg.mxu0
        %v1144 = vadd.f32 %v1121, %v1140
        %v1145 = vadd.f32 %v1122, %v1142
        %v1146 = vxor.u32 %v1144, 2147483648
        %v1147 = vxor.u32 %v1145, 2147483648
        %v1148 = vmul.f32 %v1146, 1.442695
        %v1149 = vpow.pop %v1148
        %v1150 = vmul.f32 %v1147, 1.442695
        %v1151 = vpow.pop %v1150
        %v1152 = vadd.f32 %v1149, 1.0
        %v1153 = vadd.f32 %v1151, 1.0
        %v1154 = vrcp.pop %v1152
        %v1155 = vmul.f32 %v1152, %v1154
        %v1156 = vsub.f32 1.0, %v1155
        %v1157 = vmul.f32 %v1154, %v1156
        %v1158 = vadd.f32 %v1154, %v1157
        %vm1159 = vweird.f32 %v1152
        %vm1160 = vweird.f32 %v1154
        %vm1161 = vmor %vm1159, %vm1160
        %v1162 = vsel %vm1161, %v1154, %v1158
        %v1163 = vand.u32 2147483647, %v1152
        %vm1164 = vcmp.eq.f32.partialorder %v1163, 8.507059e+37
        %v1165 = vand.u32 %v1152, 2147483648
        %v1166 = vor.u32 1.1754944e-38, %v1165
        %v1167 = vsel %vm1164, %v1166, %v1162
        %v1168 = vmul.f32 1.0, %v1167
        %v1169 = vrcp.pop %v1153
        %v1170 = vmul.f32 %v1153, %v1169
        %v1171 = vsub.f32 1.0, %v1170
        %v1172 = vmul.f32 %v1169, %v1171
        %v1173 = vadd.f32 %v1169, %v1172
        %vm1174 = vweird.f32 %v1153
        %vm1175 = vweird.f32 %v1169
        %vm1176 = vmor %vm1174, %vm1175
        %v1177 = vsel %vm1176, %v1169, %v1173
        %v1178 = vand.u32 2147483647, %v1153
        %vm1179 = vcmp.eq.f32.partialorder %v1178, 8.507059e+37
        %v1180 = vand.u32 %v1153, 2147483648
        %v1181 = vor.u32 1.1754944e-38, %v1180
        %v1182 = vsel %vm1179, %v1181, %v1177
        %v1183 = vmul.f32 1.0, %v1182
        %1186 = vrot.lane.b32.xlu0 %v1140, 64
        %v1187 = vpop.permute.xlu0 %1186
        %1188 = vrot.lane.b32.xlu0 %v1142, 64
        %v1189 = vpop.permute.xlu0 %1188
        %v1192 = vmul.f32 %v1168, %v1187
        %v1193 = vmul.f32 %v1183, %v1189
        %1196 = vrot.lane.b32.xlu0 %v1192, 64
        %v1197 = vpop.permute.xlu0 %1196
        %1198 = vrot.lane.b32.xlu0 %v1193, 64
        %v1199 = vpop.permute.xlu0 %1198
        %v1202 = vadd.f32 %v1121, %v1197
        %v1203 = vadd.f32 %v1122, %v1199
        %v1204 = vtanh.pop %v1202
        %v1205 = vtanh.pop %v1203
        %v1206 = vsub.f32 %v1116, %v1204
        %v1207 = vsub.f32 %v1117, %v1205
        %1210 = vrot.lane.b32.xlu0 %v1206, 96
        %v1211 = vpop.permute.xlu0 %1210
        %1212 = vrot.lane.b32.xlu0 %v1207, 96
        %v1213 = vpop.permute.xlu0 %1212
        %v1216 = vmul.f32 %v1168, %v1211
        %v1217 = vmul.f32 %v1183, %v1213
        %1220 = vrot.lane.b32.xlu0 %v1216, 32
        %v1221 = vpop.permute.xlu0 %1220
        %1222 = vrot.lane.b32.xlu0 %v1217, 32
        %v1223 = vpop.permute.xlu0 %1222
        %v1226 = vadd.f32 %v1204, %v1221
        %v1227 = vadd.f32 %v1205, %v1223
        %s1228 = sadd.s32 %s476, %s1118
        %v1229 = vstv %s1228
        %vm1230 = vcmp.lt.s32.totalorder %v1229, %v663
        %vm1231 = vcmp.lt.s32.totalorder %v1229, %v664
        %v1232 = vsel %vm1230, 1, 0
        %v1233 = vsel %vm1231, 1, 0
        %1234 = vset.pattern.permute.xlu0 0
        %1235 = vperm.xlu0 %1234, %v1232
        %v1236 = vpop.permute.xlu0 %1235
        %1237 = vset.pattern.permute.xlu0 0
        %1238 = vperm.xlu0 %1237, %v1233
        %v1239 = vpop.permute.xlu0 %1238
        %vm1240 = vcmp.eq.s32.totalorder %v1236, 1
        %vm1241 = vcmp.eq.s32.totalorder %v1239, 1
        %v1242 = vsel %vm1240, %v1226, 0.0
        %v1243 = vsel %vm1241, %v1227, 0.0
        %1246 = vrot.lane.b32.xlu0 %v1242, 64
        %v1247 = vpop.permute.xlu0 %1246
        %1248 = vrot.lane.b32.xlu0 %v1243, 64
        %v1249 = vpop.permute.xlu0 %1248
        %s1252 = scalar_lea.vmem %s462, %s1119
        %1253 = vst.msk [vmem:[%s1252] sm:$0xff] %vm693, %v1247
        %1254 = vst.msk [vmem:[%s1252 + $0x8] sm:$0xff] %vm693, %v1249
        %v1255 = vsel %vm1240, %v1226, %v1116
        %v1256 = vsel %vm1241, %v1227, %v1117
        %s1257 = scalar_select %p473, 4, 3
        %s1258 = smul.u32 %s1257, 16
        %s1259 = scalar_lea.vmem [#allocation2], %s1258
        %v1260 = vld [vmem:[%s1259] sm:$0xff]
        %v1261 = vld [vmem:[%s1259 + $0x8] sm:$0xff]
        %v1262 = vpack.c.bf16 %v1256, %v1255
        %1264 = vrot.lane.b32.xlu0 %v1262, 64
        %v1265 = vpop.permute.xlu0 %1264
        %v1267 = vsel %vm693, %v1265, 0
        %1269 = vmatpush.bf16.msra.mxu0 0
        %1270 = vmatpush.bf16.msra.mxu0 0
        %1271 = vmatpush.bf16.msra.mxu0 0
        %1272 = vmatpush.bf16.msra.mxu0 0
        %1273 = vmatpush.bf16.msra.mxu0 0
        %1274 = vmatpush.bf16.msra.mxu0 0
        %1275 = vmatpush.bf16.msra.mxu0 %v690
        %1276 = vmatpush.bf16.msra.mxu0 %v689
        %1277 = vmatmul.bf16.gmra.mxu0 %v1267
        %v1278 = vpop.f32.mrf.mxu0
        %v1279 = vadd.f32 %v679, %v1278
        %v1280 = vpop.f32.mrf.mxu0
        %v1281 = vadd.f32 %v679, %v1280
        %1282 = vdwg.mxu0
        %v1283 = vadd.f32 %v1260, %v1279
        %v1284 = vadd.f32 %v1261, %v1281
        %v1285 = vxor.u32 %v1283, 2147483648
        %v1286 = vxor.u32 %v1284, 2147483648
        %v1287 = vmul.f32 %v1285, 1.442695
        %v1288 = vpow.pop %v1287
        %v1289 = vmul.f32 %v1286, 1.442695
        %v1290 = vpow.pop %v1289
        %v1291 = vadd.f32 %v1288, 1.0
        %v1292 = vadd.f32 %v1290, 1.0
        %v1293 = vrcp.pop %v1291
        %v1294 = vmul.f32 %v1291, %v1293
        %v1295 = vsub.f32 1.0, %v1294
        %v1296 = vmul.f32 %v1293, %v1295
        %v1297 = vadd.f32 %v1293, %v1296
        %vm1298 = vweird.f32 %v1291
        %vm1299 = vweird.f32 %v1293
        %vm1300 = vmor %vm1298, %vm1299
        %v1301 = vsel %vm1300, %v1293, %v1297
        %v1302 = vand.u32 2147483647, %v1291
        %vm1303 = vcmp.eq.f32.partialorder %v1302, 8.507059e+37
        %v1304 = vand.u32 %v1291, 2147483648
        %v1305 = vor.u32 1.1754944e-38, %v1304
        %v1306 = vsel %vm1303, %v1305, %v1301
        %v1307 = vmul.f32 1.0, %v1306
        %v1308 = vrcp.pop %v1292
        %v1309 = vmul.f32 %v1292, %v1308
        %v1310 = vsub.f32 1.0, %v1309
        %v1311 = vmul.f32 %v1308, %v1310
        %v1312 = vadd.f32 %v1308, %v1311
        %vm1313 = vweird.f32 %v1292
        %vm1314 = vweird.f32 %v1308
        %vm1315 = vmor %vm1313, %vm1314
        %v1316 = vsel %vm1315, %v1308, %v1312
        %v1317 = vand.u32 2147483647, %v1292
        %vm1318 = vcmp.eq.f32.partialorder %v1317, 8.507059e+37
        %v1319 = vand.u32 %v1292, 2147483648
        %v1320 = vor.u32 1.1754944e-38, %v1319
        %v1321 = vsel %vm1318, %v1320, %v1316
        %v1322 = vmul.f32 1.0, %v1321
        %1325 = vrot.lane.b32.xlu0 %v1279, 64
        %v1326 = vpop.permute.xlu0 %1325
        %1327 = vrot.lane.b32.xlu0 %v1281, 64
        %v1328 = vpop.permute.xlu0 %1327
        %v1331 = vmul.f32 %v1307, %v1326
        %v1332 = vmul.f32 %v1322, %v1328
        %1335 = vrot.lane.b32.xlu0 %v1331, 64
        %v1336 = vpop.permute.xlu0 %1335
        %1337 = vrot.lane.b32.xlu0 %v1332, 64
        %v1338 = vpop.permute.xlu0 %1337
        %v1341 = vadd.f32 %v1260, %v1336
        %v1342 = vadd.f32 %v1261, %v1338
        %v1343 = vtanh.pop %v1341
        %v1344 = vtanh.pop %v1342
        %v1345 = vsub.f32 %v1255, %v1343
        %v1346 = vsub.f32 %v1256, %v1344
        %1349 = vrot.lane.b32.xlu0 %v1345, 96
        %v1350 = vpop.permute.xlu0 %1349
        %1351 = vrot.lane.b32.xlu0 %v1346, 96
        %v1352 = vpop.permute.xlu0 %1351
        %v1355 = vmul.f32 %v1307, %v1350
        %v1356 = vmul.f32 %v1322, %v1352
        %1359 = vrot.lane.b32.xlu0 %v1355, 32
        %v1360 = vpop.permute.xlu0 %1359
        %1361 = vrot.lane.b32.xlu0 %v1356, 32
        %v1362 = vpop.permute.xlu0 %1361
        %v1365 = vadd.f32 %v1343, %v1360
        %v1366 = vadd.f32 %v1344, %v1362
        %s1367 = sadd.s32 %s476, %s1257
        %v1368 = vstv %s1367
        %vm1369 = vcmp.lt.s32.totalorder %v1368, %v663
        %vm1370 = vcmp.lt.s32.totalorder %v1368, %v664
        %v1371 = vsel %vm1369, 1, 0
        %v1372 = vsel %vm1370, 1, 0
        %1373 = vset.pattern.permute.xlu0 0
        %1374 = vperm.xlu0 %1373, %v1371
        %v1375 = vpop.permute.xlu0 %1374
        %1376 = vset.pattern.permute.xlu0 0
        %1377 = vperm.xlu0 %1376, %v1372
        %v1378 = vpop.permute.xlu0 %1377
        %vm1379 = vcmp.eq.s32.totalorder %v1375, 1
        %vm1380 = vcmp.eq.s32.totalorder %v1378, 1
        %v1381 = vsel %vm1379, %v1365, 0.0
        %v1382 = vsel %vm1380, %v1366, 0.0
        %1385 = vrot.lane.b32.xlu0 %v1381, 64
        %v1386 = vpop.permute.xlu0 %1385
        %1387 = vrot.lane.b32.xlu0 %v1382, 64
        %v1388 = vpop.permute.xlu0 %1387
        %s1391 = scalar_lea.vmem %s462, %s1258
        %1392 = vst.msk [vmem:[%s1391] sm:$0xff] %vm693, %v1386
        %1393 = vst.msk [vmem:[%s1391 + $0x8] sm:$0xff] %vm693, %v1388
        %v1394 = vsel %vm1379, %v1365, %v1255
        %v1395 = vsel %vm1380, %v1366, %v1256
        %s1396 = scalar_select %p473, 5, 2
        %s1397 = smul.u32 %s1396, 16
        %s1398 = scalar_lea.vmem [#allocation2], %s1397
        %v1399 = vld [vmem:[%s1398] sm:$0xff]
        %v1400 = vld [vmem:[%s1398 + $0x8] sm:$0xff]
        %v1401 = vpack.c.bf16 %v1395, %v1394
        %1403 = vrot.lane.b32.xlu0 %v1401, 64
        %v1404 = vpop.permute.xlu0 %1403
        %v1406 = vsel %vm693, %v1404, 0
        %1408 = vmatpush.bf16.msra.mxu0 0
        %1409 = vmatpush.bf16.msra.mxu0 0
        %1410 = vmatpush.bf16.msra.mxu0 0
        %1411 = vmatpush.bf16.msra.mxu0 0
        %1412 = vmatpush.bf16.msra.mxu0 0
        %1413 = vmatpush.bf16.msra.mxu0 0
        %1414 = vmatpush.bf16.msra.mxu0 %v690
        %1415 = vmatpush.bf16.msra.mxu0 %v689
        %1416 = vmatmul.bf16.gmra.mxu0 %v1406
        %v1417 = vpop.f32.mrf.mxu0
        %v1418 = vadd.f32 %v679, %v1417
        %v1419 = vpop.f32.mrf.mxu0
        %v1420 = vadd.f32 %v679, %v1419
        %1421 = vdwg.mxu0
        %v1422 = vadd.f32 %v1399, %v1418
        %v1423 = vadd.f32 %v1400, %v1420
        %v1424 = vxor.u32 %v1422, 2147483648
        %v1425 = vxor.u32 %v1423, 2147483648
        %v1426 = vmul.f32 %v1424, 1.442695
        %v1427 = vpow.pop %v1426
        %v1428 = vmul.f32 %v1425, 1.442695
        %v1429 = vpow.pop %v1428
        %v1430 = vadd.f32 %v1427, 1.0
        %v1431 = vadd.f32 %v1429, 1.0
        %v1432 = vrcp.pop %v1430
        %v1433 = vmul.f32 %v1430, %v1432
        %v1434 = vsub.f32 1.0, %v1433
        %v1435 = vmul.f32 %v1432, %v1434
        %v1436 = vadd.f32 %v1432, %v1435
        %vm1437 = vweird.f32 %v1430
        %vm1438 = vweird.f32 %v1432
        %vm1439 = vmor %vm1437, %vm1438
        %v1440 = vsel %vm1439, %v1432, %v1436
        %v1441 = vand.u32 2147483647, %v1430
        %vm1442 = vcmp.eq.f32.partialorder %v1441, 8.507059e+37
        %v1443 = vand.u32 %v1430, 2147483648
        %v1444 = vor.u32 1.1754944e-38, %v1443
        %v1445 = vsel %vm1442, %v1444, %v1440
        %v1446 = vmul.f32 1.0, %v1445
        %v1447 = vrcp.pop %v1431
        %v1448 = vmul.f32 %v1431, %v1447
        %v1449 = vsub.f32 1.0, %v1448
        %v1450 = vmul.f32 %v1447, %v1449
        %v1451 = vadd.f32 %v1447, %v1450
        %vm1452 = vweird.f32 %v1431
        %vm1453 = vweird.f32 %v1447
        %vm1454 = vmor %vm1452, %vm1453
        %v1455 = vsel %vm1454, %v1447, %v1451
        %v1456 = vand.u32 2147483647, %v1431
        %vm1457 = vcmp.eq.f32.partialorder %v1456, 8.507059e+37
        %v1458 = vand.u32 %v1431, 2147483648
        %v1459 = vor.u32 1.1754944e-38, %v1458
        %v1460 = vsel %vm1457, %v1459, %v1455
        %v1461 = vmul.f32 1.0, %v1460
        %1464 = vrot.lane.b32.xlu0 %v1418, 64
        %v1465 = vpop.permute.xlu0 %1464
        %1466 = vrot.lane.b32.xlu0 %v1420, 64
        %v1467 = vpop.permute.xlu0 %1466
        %v1470 = vmul.f32 %v1446, %v1465
        %v1471 = vmul.f32 %v1461, %v1467
        %1474 = vrot.lane.b32.xlu0 %v1470, 64
        %v1475 = vpop.permute.xlu0 %1474
        %1476 = vrot.lane.b32.xlu0 %v1471, 64
        %v1477 = vpop.permute.xlu0 %1476
        %v1480 = vadd.f32 %v1399, %v1475
        %v1481 = vadd.f32 %v1400, %v1477
        %v1482 = vtanh.pop %v1480
        %v1483 = vtanh.pop %v1481
        %v1484 = vsub.f32 %v1394, %v1482
        %v1485 = vsub.f32 %v1395, %v1483
        %1488 = vrot.lane.b32.xlu0 %v1484, 96
        %v1489 = vpop.permute.xlu0 %1488
        %1490 = vrot.lane.b32.xlu0 %v1485, 96
        %v1491 = vpop.permute.xlu0 %1490
        %v1494 = vmul.f32 %v1446, %v1489
        %v1495 = vmul.f32 %v1461, %v1491
        %1498 = vrot.lane.b32.xlu0 %v1494, 32
        %v1499 = vpop.permute.xlu0 %1498
        %1500 = vrot.lane.b32.xlu0 %v1495, 32
        %v1501 = vpop.permute.xlu0 %1500
        %v1504 = vadd.f32 %v1482, %v1499
        %v1505 = vadd.f32 %v1483, %v1501
        %s1506 = sadd.s32 %s476, %s1396
        %v1507 = vstv %s1506
        %vm1508 = vcmp.lt.s32.totalorder %v1507, %v663
        %vm1509 = vcmp.lt.s32.totalorder %v1507, %v664
        %v1510 = vsel %vm1508, 1, 0
        %v1511 = vsel %vm1509, 1, 0
        %1512 = vset.pattern.permute.xlu0 0
        %1513 = vperm.xlu0 %1512, %v1510
        %v1514 = vpop.permute.xlu0 %1513
        %1515 = vset.pattern.permute.xlu0 0
        %1516 = vperm.xlu0 %1515, %v1511
        %v1517 = vpop.permute.xlu0 %1516
        %vm1518 = vcmp.eq.s32.totalorder %v1514, 1
        %vm1519 = vcmp.eq.s32.totalorder %v1517, 1
        %v1520 = vsel %vm1518, %v1504, 0.0
        %v1521 = vsel %vm1519, %v1505, 0.0
        %1524 = vrot.lane.b32.xlu0 %v1520, 64
        %v1525 = vpop.permute.xlu0 %1524
        %1526 = vrot.lane.b32.xlu0 %v1521, 64
        %v1527 = vpop.permute.xlu0 %1526
        %s1530 = scalar_lea.vmem %s462, %s1397
        %1531 = vst.msk [vmem:[%s1530] sm:$0xff] %vm693, %v1525
        %1532 = vst.msk [vmem:[%s1530 + $0x8] sm:$0xff] %vm693, %v1527
        %v1533 = vsel %vm1518, %v1504, %v1394
        %v1534 = vsel %vm1519, %v1505, %v1395
        %s1535 = scalar_select %p473, 6, 1
        %s1536 = smul.u32 %s1535, 16
        %s1537 = scalar_lea.vmem [#allocation2], %s1536
        %v1538 = vld [vmem:[%s1537] sm:$0xff]
        %v1539 = vld [vmem:[%s1537 + $0x8] sm:$0xff]
        %v1540 = vpack.c.bf16 %v1534, %v1533
        %1542 = vrot.lane.b32.xlu0 %v1540, 64
        %v1543 = vpop.permute.xlu0 %1542
        %v1545 = vsel %vm693, %v1543, 0
        %1547 = vmatpush.bf16.msra.mxu0 0
        %1548 = vmatpush.bf16.msra.mxu0 0
        %1549 = vmatpush.bf16.msra.mxu0 0
        %1550 = vmatpush.bf16.msra.mxu0 0
        %1551 = vmatpush.bf16.msra.mxu0 0
        %1552 = vmatpush.bf16.msra.mxu0 0
        %1553 = vmatpush.bf16.msra.mxu0 %v690
        %1554 = vmatpush.bf16.msra.mxu0 %v689
        %1555 = vmatmul.bf16.gmra.mxu0 %v1545
        %v1556 = vpop.f32.mrf.mxu0
        %v1557 = vadd.f32 %v679, %v1556
        %v1558 = vpop.f32.mrf.mxu0
        %v1559 = vadd.f32 %v679, %v1558
        %1560 = vdwg.mxu0
        %v1561 = vadd.f32 %v1538, %v1557
        %v1562 = vadd.f32 %v1539, %v1559
        %v1563 = vxor.u32 %v1561, 2147483648
        %v1564 = vxor.u32 %v1562, 2147483648
        %v1565 = vmul.f32 %v1563, 1.442695
        %v1566 = vpow.pop %v1565
        %v1567 = vmul.f32 %v1564, 1.442695
        %v1568 = vpow.pop %v1567
        %v1569 = vadd.f32 %v1566, 1.0
        %v1570 = vadd.f32 %v1568, 1.0
        %v1571 = vrcp.pop %v1569
        %v1572 = vmul.f32 %v1569, %v1571
        %v1573 = vsub.f32 1.0, %v1572
        %v1574 = vmul.f32 %v1571, %v1573
        %v1575 = vadd.f32 %v1571, %v1574
        %vm1576 = vweird.f32 %v1569
        %vm1577 = vweird.f32 %v1571
        %vm1578 = vmor %vm1576, %vm1577
        %v1579 = vsel %vm1578, %v1571, %v1575
        %v1580 = vand.u32 2147483647, %v1569
        %vm1581 = vcmp.eq.f32.partialorder %v1580, 8.507059e+37
        %v1582 = vand.u32 %v1569, 2147483648
        %v1583 = vor.u32 1.1754944e-38, %v1582
        %v1584 = vsel %vm1581, %v1583, %v1579
        %v1585 = vmul.f32 1.0, %v1584
        %v1586 = vrcp.pop %v1570
        %v1587 = vmul.f32 %v1570, %v1586
        %v1588 = vsub.f32 1.0, %v1587
        %v1589 = vmul.f32 %v1586, %v1588
        %v1590 = vadd.f32 %v1586, %v1589
        %vm1591 = vweird.f32 %v1570
        %vm1592 = vweird.f32 %v1586
        %vm1593 = vmor %vm1591, %vm1592
        %v1594 = vsel %vm1593, %v1586, %v1590
        %v1595 = vand.u32 2147483647, %v1570
        %vm1596 = vcmp.eq.f32.partialorder %v1595, 8.507059e+37
        %v1597 = vand.u32 %v1570, 2147483648
        %v1598 = vor.u32 1.1754944e-38, %v1597
        %v1599 = vsel %vm1596, %v1598, %v1594
        %v1600 = vmul.f32 1.0, %v1599
        %1603 = vrot.lane.b32.xlu0 %v1557, 64
        %v1604 = vpop.permute.xlu0 %1603
        %1605 = vrot.lane.b32.xlu0 %v1559, 64
        %v1606 = vpop.permute.xlu0 %1605
        %v1609 = vmul.f32 %v1585, %v1604
        %v1610 = vmul.f32 %v1600, %v1606
        %1613 = vrot.lane.b32.xlu0 %v1609, 64
        %v1614 = vpop.permute.xlu0 %1613
        %1615 = vrot.lane.b32.xlu0 %v1610, 64
        %v1616 = vpop.permute.xlu0 %1615
        %v1619 = vadd.f32 %v1538, %v1614
        %v1620 = vadd.f32 %v1539, %v1616
        %v1621 = vtanh.pop %v1619
        %v1622 = vtanh.pop %v1620
        %v1623 = vsub.f32 %v1533, %v1621
        %v1624 = vsub.f32 %v1534, %v1622
        %1627 = vrot.lane.b32.xlu0 %v1623, 96
        %v1628 = vpop.permute.xlu0 %1627
        %1629 = vrot.lane.b32.xlu0 %v1624, 96
        %v1630 = vpop.permute.xlu0 %1629
        %v1633 = vmul.f32 %v1585, %v1628
        %v1634 = vmul.f32 %v1600, %v1630
        %1637 = vrot.lane.b32.xlu0 %v1633, 32
        %v1638 = vpop.permute.xlu0 %1637
        %1639 = vrot.lane.b32.xlu0 %v1634, 32
        %v1640 = vpop.permute.xlu0 %1639
        %v1643 = vadd.f32 %v1621, %v1638
        %v1644 = vadd.f32 %v1622, %v1640
        %s1645 = sadd.s32 %s476, %s1535
        %v1646 = vstv %s1645
        %vm1647 = vcmp.lt.s32.totalorder %v1646, %v663
        %vm1648 = vcmp.lt.s32.totalorder %v1646, %v664
        %v1649 = vsel %vm1647, 1, 0
        %v1650 = vsel %vm1648, 1, 0
        %1651 = vset.pattern.permute.xlu0 0
        %1652 = vperm.xlu0 %1651, %v1649
        %v1653 = vpop.permute.xlu0 %1652
        %1654 = vset.pattern.permute.xlu0 0
        %1655 = vperm.xlu0 %1654, %v1650
        %v1656 = vpop.permute.xlu0 %1655
        %vm1657 = vcmp.eq.s32.totalorder %v1653, 1
        %vm1658 = vcmp.eq.s32.totalorder %v1656, 1
        %v1659 = vsel %vm1657, %v1643, 0.0
        %v1660 = vsel %vm1658, %v1644, 0.0
        %1663 = vrot.lane.b32.xlu0 %v1659, 64
        %v1664 = vpop.permute.xlu0 %1663
        %1665 = vrot.lane.b32.xlu0 %v1660, 64
        %v1666 = vpop.permute.xlu0 %1665
        %s1669 = scalar_lea.vmem %s462, %s1536
        %1670 = vst.msk [vmem:[%s1669] sm:$0xff] %vm693, %v1664
        %1671 = vst.msk [vmem:[%s1669 + $0x8] sm:$0xff] %vm693, %v1666
        %v1672 = vsel %vm1657, %v1643, %v1533
        %v1673 = vsel %vm1658, %v1644, %v1534
        %s1674 = scalar_select %p473, 7, 0
        %s1675 = smul.u32 %s1674, 16
        %s1676 = scalar_lea.vmem [#allocation2], %s1675
        %v1677 = vld [vmem:[%s1676] sm:$0xff]
        %v1678 = vld [vmem:[%s1676 + $0x8] sm:$0xff]
        %v1679 = vpack.c.bf16 %v1673, %v1672
        %1681 = vrot.lane.b32.xlu0 %v1679, 64
        %v1682 = vpop.permute.xlu0 %1681
        %v1684 = vsel %vm693, %v1682, 0
        %1686 = vmatpush.bf16.msra.mxu0 0
        %1687 = vmatpush.bf16.msra.mxu0 0
        %1688 = vmatpush.bf16.msra.mxu0 0
        %1689 = vmatpush.bf16.msra.mxu0 0
        %1690 = vmatpush.bf16.msra.mxu0 0
        %1691 = vmatpush.bf16.msra.mxu0 0
        %1692 = vmatpush.bf16.msra.mxu0 %v690
        %1693 = vmatpush.bf16.msra.mxu0 %v689
        %1694 = vmatmul.bf16.gmra.mxu0 %v1684
        %v1695 = vpop.f32.mrf.mxu0
        %v1696 = vadd.f32 %v679, %v1695
        %v1697 = vpop.f32.mrf.mxu0
        %v1698 = vadd.f32 %v679, %v1697
        %1699 = vdwg.mxu0
        %v1700 = vadd.f32 %v1677, %v1696
        %v1701 = vadd.f32 %v1678, %v1698
        %v1702 = vxor.u32 %v1700, 2147483648
        %v1703 = vxor.u32 %v1701, 2147483648
        %v1704 = vmul.f32 %v1702, 1.442695
        %v1705 = vpow.pop %v1704
        %v1706 = vmul.f32 %v1703, 1.442695
        %v1707 = vpow.pop %v1706
        %v1708 = vadd.f32 %v1705, 1.0
        %v1709 = vadd.f32 %v1707, 1.0
        %v1710 = vrcp.pop %v1708
        %v1711 = vmul.f32 %v1708, %v1710
        %v1712 = vsub.f32 1.0, %v1711
        %v1713 = vmul.f32 %v1710, %v1712
        %v1714 = vadd.f32 %v1710, %v1713
        %vm1715 = vweird.f32 %v1708
        %vm1716 = vweird.f32 %v1710
        %vm1717 = vmor %vm1715, %vm1716
        %v1718 = vsel %vm1717, %v1710, %v1714
        %v1719 = vand.u32 2147483647, %v1708
        %vm1720 = vcmp.eq.f32.partialorder %v1719, 8.507059e+37
        %v1721 = vand.u32 %v1708, 2147483648
        %v1722 = vor.u32 1.1754944e-38, %v1721
        %v1723 = vsel %vm1720, %v1722, %v1718
        %v1724 = vmul.f32 1.0, %v1723
        %v1725 = vrcp.pop %v1709
        %v1726 = vmul.f32 %v1709, %v1725
        %v1727 = vsub.f32 1.0, %v1726
        %v1728 = vmul.f32 %v1725, %v1727
        %v1729 = vadd.f32 %v1725, %v1728
        %vm1730 = vweird.f32 %v1709
        %vm1731 = vweird.f32 %v1725
        %vm1732 = vmor %vm1730, %vm1731
        %v1733 = vsel %vm1732, %v1725, %v1729
        %v1734 = vand.u32 2147483647, %v1709
        %vm1735 = vcmp.eq.f32.partialorder %v1734, 8.507059e+37
        %v1736 = vand.u32 %v1709, 2147483648
        %v1737 = vor.u32 1.1754944e-38, %v1736
        %v1738 = vsel %vm1735, %v1737, %v1733
        %v1739 = vmul.f32 1.0, %v1738
        %1742 = vrot.lane.b32.xlu0 %v1696, 64
        %v1743 = vpop.permute.xlu0 %1742
        %1744 = vrot.lane.b32.xlu0 %v1698, 64
        %v1745 = vpop.permute.xlu0 %1744
        %v1748 = vmul.f32 %v1724, %v1743
        %v1749 = vmul.f32 %v1739, %v1745
        %1752 = vrot.lane.b32.xlu0 %v1748, 64
        %v1753 = vpop.permute.xlu0 %1752
        %1754 = vrot.lane.b32.xlu0 %v1749, 64
        %v1755 = vpop.permute.xlu0 %1754
        %v1758 = vadd.f32 %v1677, %v1753
        %v1759 = vadd.f32 %v1678, %v1755
        %v1760 = vtanh.pop %v1758
        %v1761 = vtanh.pop %v1759
        %v1762 = vsub.f32 %v1672, %v1760
        %v1763 = vsub.f32 %v1673, %v1761
        %1766 = vrot.lane.b32.xlu0 %v1762, 96
        %v1767 = vpop.permute.xlu0 %1766
        %1768 = vrot.lane.b32.xlu0 %v1763, 96
        %v1769 = vpop.permute.xlu0 %1768
        %v1772 = vmul.f32 %v1724, %v1767
        %v1773 = vmul.f32 %v1739, %v1769
        %1776 = vrot.lane.b32.xlu0 %v1772, 32
        %v1777 = vpop.permute.xlu0 %1776
        %1778 = vrot.lane.b32.xlu0 %v1773, 32
        %v1779 = vpop.permute.xlu0 %1778
        %v1782 = vadd.f32 %v1760, %v1777
        %v1783 = vadd.f32 %v1761, %v1779
        %s1784 = sadd.s32 %s476, %s1674
        %v1785 = vstv %s1784
        %vm1786 = vcmp.lt.s32.totalorder %v1785, %v663
        %vm1787 = vcmp.lt.s32.totalorder %v1785, %v664
        %v1788 = vsel %vm1786, 1, 0
        %v1789 = vsel %vm1787, 1, 0
        %1790 = vset.pattern.permute.xlu0 0
        %1791 = vperm.xlu0 %1790, %v1788
        %v1792 = vpop.permute.xlu0 %1791
        %1793 = vset.pattern.permute.xlu0 0
        %1794 = vperm.xlu0 %1793, %v1789
        %v1795 = vpop.permute.xlu0 %1794
        %vm1796 = vcmp.eq.s32.totalorder %v1792, 1
        %vm1797 = vcmp.eq.s32.totalorder %v1795, 1
        %v1798 = vsel %vm1796, %v1782, 0.0
        %v1799 = vsel %vm1797, %v1783, 0.0
        %1802 = vrot.lane.b32.xlu0 %v1798, 64
        %v1803 = vpop.permute.xlu0 %1802
        %1804 = vrot.lane.b32.xlu0 %v1799, 64
        %v1805 = vpop.permute.xlu0 %1804
        %s1808 = scalar_lea.vmem %s462, %s1675
        %1809 = vst.msk [vmem:[%s1808] sm:$0xff] %vm693, %v1803
        %1810 = vst.msk [vmem:[%s1808 + $0x8] sm:$0xff] %vm693, %v1805
        %v1811 = vsel %vm1796, %v1782, %v1672
        %v1812 = vsel %vm1797, %v1783, %v1673
        %1815 = vrot.lane.b32.xlu0 %v1811, 64
        %v1816 = vpop.permute.xlu0 %1815
        %1817 = vrot.lane.b32.xlu0 %v1812, 64
        %v1818 = vpop.permute.xlu0 %1817
        %1821 = vst.msk [vmem:[#allocation3] sm:$0xff] %vm693, %v1816
        %1822 = vst.msk [vmem:[#allocation3 + $0x8] sm:$0xff] %vm693, %v1818
      $region56: #{gru_encoder_pallas.1} parent=47 // pred_fallthru
        _
      %p1823 = scmp.ge.s32.totalorder %s476, %s486
      // Predicated region
      $region57: #{gru_encoder_pallas.1} parent=47 // pred_check
        %p1824 = pneg %p1823
      $region58: #{gru_encoder_pallas.1} parent=47 // pred_check_branch
        %1826 = sbr.rel (%p1824) target = $region60
      $region59: #{gru_encoder_pallas.1} parent=47 // pred_region
        %vm1827 = vcmask 261120
        %1828 = vst.msk [vmem:[%s462] sm:$0xff] %vm1827, 0.0
        %1829 = vst.msk [vmem:[%s462 + $0x8] sm:$0xff] %vm1827, 0.0
        %1830 = vst.msk [vmem:[%s462 + $0x10] sm:$0xff] %vm1827, 0.0
        %1831 = vst.msk [vmem:[%s462 + $0x18] sm:$0xff] %vm1827, 0.0
        %1832 = vst.msk [vmem:[%s462 + $0x20] sm:$0xff] %vm1827, 0.0
        %1833 = vst.msk [vmem:[%s462 + $0x28] sm:$0xff] %vm1827, 0.0
        %1834 = vst.msk [vmem:[%s462 + $0x30] sm:$0xff] %vm1827, 0.0
        %1835 = vst.msk [vmem:[%s462 + $0x38] sm:$0xff] %vm1827, 0.0
        %1836 = vst.msk [vmem:[%s462 + $0x40] sm:$0xff] %vm1827, 0.0
        %1837 = vst.msk [vmem:[%s462 + $0x48] sm:$0xff] %vm1827, 0.0
        %1838 = vst.msk [vmem:[%s462 + $0x50] sm:$0xff] %vm1827, 0.0
        %1839 = vst.msk [vmem:[%s462 + $0x58] sm:$0xff] %vm1827, 0.0
        %1840 = vst.msk [vmem:[%s462 + $0x60] sm:$0xff] %vm1827, 0.0
        %1841 = vst.msk [vmem:[%s462 + $0x68] sm:$0xff] %vm1827, 0.0
        %1842 = vst.msk [vmem:[%s462 + $0x70] sm:$0xff] %vm1827, 0.0
        %1843 = vst.msk [vmem:[%s462 + $0x78] sm:$0xff] %vm1827, 0.0
      $region60: #{gru_encoder_pallas.1} parent=47 // pred_fallthru
        _
      // Predicated region
      $region61: #{gru_encoder_pallas.1} parent=47 // pred_check
        %p1844 = pneg %p477
      $region62: #{gru_encoder_pallas.1} parent=47 // pred_check_branch
        %1846 = sbr.rel (%p1844) target = $region64
      $region63: #{gru_encoder_pallas.1} parent=47 // pred_region
        %v1847 = vld [vmem:[#allocation3] sm:$0xff]
        %v1848 = vld [vmem:[#allocation3 + $0x8] sm:$0xff]
        %vm1849 = vcmask 261120
        %1850 = vst.msk [vmem:[%s471] sm:$0xff] %vm1849, %v1847
        %1851 = vst.msk [vmem:[%s471 + $0x8] sm:$0xff] %vm1849, %v1848
      $region64: #{gru_encoder_pallas.1} parent=47 // pred_fallthru
        _
      %p1852 = scmp.eq.s32.totalorder %s26, 0
      %s1853 = ssub.s32 0, %s27
      %s1854 = scalar_select %p1852, %s27, %s1853
      %s1855 = smul.u32 8, %s1854
      %p1856 = scmp.lt.s32.totalorder %s26, 1
      %s1857 = scalar_select %p1856, %s26, 1
      %p1858 = scmp.lt.s32.totalorder %s1855, 7
      %s1859 = scalar_select %p1858, %s1855, 7
      %s1860 = smul.addr %s1859, 2
      %s1861 = smul.addr %s1857, 16
      %s1862 = sadd.s32 %s1860, %s1861
      %s1863 = smul.addr %s1862, 8
      %s1864 = scalar_lea.vmem %s8, %s1863
      %p1865 = scmp.lt.s32.totalorder %s26, 1
      %s1866 = scalar_select %p1865, %s26, 1
      %s1867 = smul.addr %s1866, 2
      %s1868 = smul.addr %s1867, 8
      %s1869 = scalar_lea.vmem %s9, %s1868
      // Predicated region
      $region65: #{gru_encoder_pallas.1} parent=47 // pred_check
        %p1870 = pneg %p243
      $region66: #{gru_encoder_pallas.1} parent=47 // pred_check_branch
        %1872 = sbr.rel (%p1870) target = $region68
      $region67: #{gru_encoder_pallas.1} parent=47 // pred_region
        %p1873 = scmp.eq.s32.totalorder %s26, 0
        %s1874 = ssub.s32 0, %s27
        %s1875 = scalar_select %p1873, %s27, %s1874
        %s1876 = smul.u32 8, %s1875
      $region68: #{gru_encoder_pallas.1} parent=47 // pred_fallthru
        _
      // Predicated region
      $region69: #{gru_encoder_pallas.1} parent=47 // pred_check
        %p1877 = pneg %p269
      $region70: #{gru_encoder_pallas.1} parent=47 // pred_check_branch
        %1879 = sbr.rel (%p1877) target = $region72
      $region71: #{gru_encoder_pallas.1} parent=47 // pred_region
        _
      $region72: #{gru_encoder_pallas.1} parent=47 // pred_fallthru
        _
    $region48: #{gru_encoder_pallas.1} parent=5 // pred_fallthru
      _
    %p1880 = scmp.le.s32.totalorder 2, %s17
    // Predicated region
    $region73: #{gru_encoder_pallas.1} parent=5 // pred_check
      %p1881 = pneg %p1880
    $region74: #{gru_encoder_pallas.1} parent=5 // pred_check_branch
      %1883 = sbr.rel (%p1881) target = $region76
    $region75: #{gru_encoder_pallas.1} parent=5 // pred_region
      %s1884 = ssub.s32 %s17, 2
      // Predicated region
      $region77: #{gru_encoder_pallas.1} parent=75 // pred_check
        %p1885 = pneg %p249
      $region78: #{gru_encoder_pallas.1} parent=75 // pred_check_branch
        %1887 = sbr.rel (%p1885) target = $region80
      $region79: #{gru_encoder_pallas.1} parent=75 // pred_region
        %p1888 = scmp.eq.s32.totalorder %s28, 0
        %s1889 = ssub.s32 0, %s29
        %s1890 = scalar_select %p1888, %s29, %s1889
        %s1891 = smul.u32 8, %s1890
        %p1892 = scmp.lt.s32.totalorder %s28, 1
        %s1893 = scalar_select %p1892, %s28, 1
        %p1894 = scmp.lt.s32.totalorder %s1891, 7
        %s1895 = scalar_select %p1894, %s1891, 7
        %s1896 = smul.addr %s1895, 2
        %s1897 = smul.addr %s1893, 16
        %s1898 = sadd.s32 %s1896, %s1897
        %s1899 = smul.addr %s1898, 8
        %s1900 = scalar_lea.vmem %s8, %s1899
      $region80: #{gru_encoder_pallas.1} parent=75 // pred_fallthru
        _
      // Predicated region
      $region81: #{gru_encoder_pallas.1} parent=75 // pred_check
        %p1901 = pneg %p275
      $region82: #{gru_encoder_pallas.1} parent=75 // pred_check_branch
        %1903 = sbr.rel (%p1901) target = $region84
      $region83: #{gru_encoder_pallas.1} parent=75 // pred_region
        %p1904 = scmp.lt.s32.totalorder %s28, 1
        %s1905 = scalar_select %p1904, %s28, 1
        %s1906 = smul.addr %s1905, 2
        %s1907 = smul.addr %s1906, 8
        %s1908 = scalar_lea.vmem %s9, %s1907
      $region84: #{gru_encoder_pallas.1} parent=75 // pred_fallthru
        _
    $region76: #{gru_encoder_pallas.1} parent=5 // pred_fallthru
      _
  $region6: #{gru_encoder_pallas.1} parent=0 // loop_footer
    %s21 = sadd.s32 1, %s17
  $region7: #{gru_encoder_pallas.1} parent=0 // loop_footer_branch
    %16 = sbr.rel target = $region3
  $region8: #{gru_encoder_pallas.1} parent=0 // loop_exit
    _

</llo_original>
